<compile_context>
chip_gen: v7x
topology: tpu7x:2x2x1
jax: 0.10.0
libtpu: 0.0.40
codegen_flags: <defaults>
</compile_context>

<pallas_src>
import functools

import jax
import jax.numpy as jnp
import numpy as np
from jax.experimental import pallas as pl
from jax.experimental.pallas import tpu as pltpu


# ----------------------------------------------------------------------------- Pallas kernel

def _make_sa_kernel(num_layers: int, nsample: int, tp: int):
    """Fused (1x1 conv + BN + ReLU) MLP over all S*TP points at once, tree-max over S, mask on store."""

    def kernel(x_ref, m_ref, *rest):
        # x_ref  : (1, 1, Cin, S*TP) bf16   grouped (relative-xyz ++ features); lane l = s*TP + t
        # m_ref  : (1, 1, TP)        f32    (idx_cnt > 0) mask, lane-dense over centers
        # rest   : W1, b1, ..., WL, bL, out_ref
        #   W_l  : (Cout_l, Cin_l)   bf16
        #   b_l  : (Cout_l, 1)       f32
        # out_ref: (1, Cout, TP)     f32
        wb_refs = rest[: 2 * num_layers]
        o_ref = rest[2 * num_layers]

        h = x_ref[0, 0]                                   # (Cin, S*TP) bf16
        for l in range(num_layers):
            w = wb_refs[2 * l][...]                       # (Cout_l, Cin_l) bf16
            b = wb_refs[2 * l + 1][...]                   # (Cout_l, 1)     f32
            y = jnp.dot(w, h, preferred_element_type=jnp.float32) + b
            y = jnp.maximum(y, 0.0)                       # bias + ReLU in f32 (VPU)
            h = y.astype(jnp.bfloat16) if l + 1 < num_layers else y

        # max-pool over the S sample groups: static lane-aligned slices (TP multiple of 128),
        # reduced with a balanced tree of VPU maximums -> stays in registers, no VMEM scratch.
        parts = [h[:, s * tp:(s + 1) * tp] for s in range(nsample)]
        while len(parts) > 1:
            nxt = [jnp.maximum(parts[i], parts[i + 1]) for i in range(0, len(parts) - 1, 2)]
            if len(parts) % 2:
                nxt.append(parts[-1])
            parts = nxt
        pooled = parts[0]                                 # (Cout, TP) f32, >= 0 (post-ReLU)

        # Masking after the max == masking before it because every layer ends in ReLU (values >= 0)
        # and empty balls gather index 0 (finite values).  Would be invalid for a ReLU-less last layer.
        o_ref[0] = (pooled * m_ref[0]).astype(o_ref.dtype)

    return kernel


def _choose_tp(Ppad: int, nsample: int, cin_pad: int, couts, B: int,
               budget_bytes: int = 12 << 20) -> int:
    """Largest power-of-two center tile (>=128) whose VMEM footprint stays modest (v7x: 64 MiB)."""
    per_lane = nsample * (4 * cin_pad + 8 * max(couts))   # rough bytes per output lane
    tp = 128
    while tp * 2 <= 2048 and Ppad % (tp * 2) == 0 and per_lane * tp * 2 <= budget_bytes:
        tp *= 2
    # keep >= 2 grid tiles so both v7x TensorCores get work (no-op on 1-TC v5e/v6e)
    while B * (Ppad // tp) < 2 and tp > 128:
        tp //= 2
    return tp


def sa_mlp_pool(grouped, cnt_mask, Ws, bs, cin_pad, nsample, tp, out_dtype=jnp.float32):
    """grouped: (B, Pt, Cin_pad, S, TP) bf16, cnt_mask: (B, 1, Ppad) f32 -> (B, Cout, Ppad)."""
    B, Pt, Cin, S, TP = grouped.shape
    assert Cin == cin_pad and S == nsample and TP == tp and TP % 128 == 0
    Ppad = Pt * TP
    Cout = Ws[-1].shape[0]
    num_layers = len(Ws)

    # merge (S, TP) -> lanes; contiguous reshape, no copy
    x = grouped.reshape(B, Pt, Cin, S * TP)

    # pad the first-layer weight columns to the padded channel count (padded input rows are zero)
    W0 = Ws[0]
    if W0.shape[1] < cin_pad:
        W0 = jnp.pad(W0, ((0, 0), (0, cin_pad - W0.shape[1])))
    Wk = [W0.astype(jnp.bfloat16)] + [w.astype(jnp.bfloat16) for w in Ws[1:]]

    in_specs = [
        pl.BlockSpec((1, 1, Cin, S * TP), lambda b, pt: (b, pt, 0, 0)),
        pl.BlockSpec((1, 1, TP), lambda b, pt: (b, 0, pt)),
    ]
    args = [x, cnt_mask]
    for w, bia in zip(Wk, bs):
        in_specs.append(pl.BlockSpec(w.shape, lambda b, pt: (0, 0)))
        in_specs.append(pl.BlockSpec(bia.shape, lambda b, pt: (0, 0)))
        args += [w, bia]

    flops = 2 * B * Ppad * S * sum(int(w.shape[0]) * int(w.shape[1]) for w in Wk)
    bytes_accessed = (
        x.size * 2 + cnt_mask.size * 4
        + sum(w.size * 2 + bb.size * 4 for w, bb in zip(Wk, bs))
        + B * Cout * Ppad * 4
    )

    # VMEM footprint: double-buffered input/mask/output blocks + f32/bf16 intermediates + margin
    block_in = Cin * S * TP * 2
    block_inter = sum(int(w.shape[0]) for w in Wk) * S * TP * 6
    block_out = Cout * TP * 4
    vmem_est = 2 * block_in + block_inter + 2 * block_out + 2 * TP * 4 + (1 << 20)
    vmem_limit = int(min(max(2 * vmem_est, 8 << 20), 64 << 20))

    return pl.pallas_call(
        _make_sa_kernel(num_layers, S, TP),
        out_shape=jax.ShapeDtypeStruct((B, Cout, Ppad), out_dtype),
        grid=(B, Pt),
        in_specs=in_specs,
        out_specs=pl.BlockSpec((1, Cout, TP), lambda b, pt: (b, 0, pt)),
        compiler_params=pltpu.CompilerParams(
            dimension_semantics=("parallel", "parallel"),
            vmem_limit_bytes=vmem_limit,
        ),
        cost_estimate=pl.CostEstimate(
            flops=flops, transcendentals=0, bytes_accessed=bytes_accessed
        ),
    )(*args)


# ----------------------------------------------------------------------------- JAX glue

def farthest_point_sample(xyz, npoint):
    """xyz: (B, N, 3) -> (B, npoint) int32 indices (matches pcdet CUDA FPS)."""
    B, N, _ = xyz.shape

    def body(i, state):
        idxs, dists, farthest = state
        idxs = jax.lax.dynamic_update_slice(idxs, farthest[:, None], (0, i))
        centroid = jax.vmap(lambda pts, j: pts[j])(xyz, farthest)[:, None, :]  # (B,1,3)
        d = jnp.sum((xyz - centroid) ** 2, axis=-1)                            # (B,N)
        dists = jnp.minimum(dists, d)
        farthest = jnp.argmax(dists, axis=-1).astype(jnp.int32)
        return idxs, dists, farthest

    idxs0 = jnp.zeros((B, npoint), jnp.int32)
    dists0 = jnp.full((B, N), 1e10, jnp.float32)
    far0 = jnp.zeros((B,), jnp.int32)
    idxs, _, _ = jax.lax.fori_loop(0, npoint, body, (idxs0, dists0, far0))
    return idxs


def ball_query(radius, nsample, xyz, new_xyz):
    """Returns (idx_cnt (B,P), idx (B,P,nsample)) matching pcdet ball_query semantics.

    Uses lax.top_k of width nsample instead of a full argsort over N.
    """
    N = xyz.shape[1]
    d2 = jnp.sum((new_xyz[:, :, None, :] - xyz[:, None, :, :]) ** 2, axis=-1)  # (B,P,N)
    in_r = d2 < radius * radius
    cnt = jnp.minimum(jnp.sum(in_r, axis=-1), nsample).astype(jnp.int32)       # (B,P)

    order = jnp.arange(N, dtype=jnp.int32)
    # in-radius points get keys > 0 ordered by increasing index; others get keys <= 0
    key = jnp.where(in_r, N - order, -order)
    _, sidx = jax.lax.top_k(key, nsample)                    # (B,P,nsample) int32
    sidx = sidx.astype(jnp.int32)

    pos = jnp.arange(nsample, dtype=jnp.int32)
    valid = pos[None, None, :] < cnt[..., None]
    idx = jnp.where(valid, sidx, sidx[..., :1])              # pad with first found index
    idx = jnp.where(cnt[..., None] > 0, idx, 0)              # empty ball -> index 0 (masked later)
    return cnt, idx


def _prepare_group(xyz, features_cf, new_xyz_pad, radius, nsample, tp, cin_pad):
    """Gather grouped points directly in kernel layout.

    xyz (B,N,3), features_cf (B,C,N), new_xyz_pad (B,Ppad,3)
    -> grouped (B, Pt, cin_pad, nsample, TP) bf16, cnt_mask (B, 1, Ppad) f32
    """
    # TODO(synk): an in-kernel gather (scalar-prefetched idx + manual DMA) would avoid this
    #             HBM-materialized grouped tensor entirely; kept as JAX glue for now.
    cnt, idx = ball_query(radius, nsample, xyz, new_xyz_pad)     # (B,Ppad), (B,Ppad,S)
    B, Ppad, S = idx.shape
    Pt = Ppad // tp
    idx_t = idx.reshape(B, Pt, tp, S)
    nxyz_t = new_xyz_pad.reshape(B, Pt, tp, 3)

    def per_b(xyz_b, feat_b, nxyz_b, idx_b):
        g_xyz = xyz_b[idx_b] - nxyz_b[:, :, None, :]             # (Pt, TP, S, 3) relative coords
        g_xyz = jnp.transpose(g_xyz, (0, 3, 2, 1))               # (Pt, 3, S, TP)
        g_feat = jnp.transpose(feat_b[:, idx_b], (1, 0, 3, 2))   # (Pt, C, S, TP)
        return jnp.concatenate([g_xyz, g_feat], axis=1)          # (Pt, 3+C, S, TP)  use_xyz=True

    grouped = jax.vmap(per_b)(xyz, features_cf, nxyz_t, idx_t)   # (B, Pt, Cin, S, TP)
    cin = grouped.shape[2]
    if cin_pad > cin:
        grouped = jnp.pad(grouped, ((0, 0), (0, 0), (0, cin_pad - cin), (0, 0), (0, 0)))
    grouped = grouped.astype(jnp.bfloat16)
    cnt_mask = (cnt > 0).astype(jnp.float32)[:, None, :]         # (B, 1, Ppad) lane-dense
    return grouped, cnt_mask


def pointnet_sa_forward(xyz, features, npoint, grouper_cfgs, mlp_params):
    """xyz (B,N,3), features (B,C,N) -> (new_xyz (B,npoint,3), new_features (B,sumCout,npoint))."""
    B = xyz.shape[0]
    fps_idx = farthest_point_sample(xyz, npoint)
    new_xyz = jax.vmap(lambda p, i: p[i])(xyz, fps_idx)          # (B, npoint, 3)

    P = npoint
    Ppad = ((P + 127) // 128) * 128                              # lane-dense center axis
    new_xyz_pad = jnp.pad(new_xyz, ((0, 0), (0, Ppad - P), (0, 0)))

    outs = []
    for (radius, nsample), (Ws, bs) in zip(grouper_cfgs, mlp_params):
        cin = Ws[0].shape[1]
        cin_pad = ((cin + 15) // 16) * 16                        # dense bf16 sublane packing
        couts = [int(w.shape[0]) for w in Ws]
        tp = _choose_tp(Ppad, nsample, cin_pad, couts, B)
        grouped, cnt_mask = _prepare_group(xyz, features, new_xyz_pad, radius, nsample, tp, cin_pad)
        outs.append(sa_mlp_pool(grouped, cnt_mask, Ws, bs, cin_pad, nsample, tp))

    new_features = jnp.concatenate(outs, axis=1)[:, :, :P]       # drop center padding
    return new_xyz, new_features


# ----------------------------------------------------------------------------- params

def make_fused_mlp_params(key, channel_list):
    """Conv2d(1x1, bias=False) + BatchNorm2d(eval) fused into (W (Cout,Cin) f32, b (Cout,1) f32)."""
    Ws, bs = [], []
    eps = 1e-5
    for cin, cout in zip(channel_list[:-1], channel_list[1:]):
        key, k1 = jax.random.split(key)
        w = jax.random.normal(k1, (cout, cin), jnp.float32) * 0.2   # conv weight (Cout, Cin, 1, 1)
        gamma = 1.0 + 0.05 * jnp.arange(cout, dtype=jnp.float32)
        beta = 0.01 * jnp.arange(cout, dtype=jnp.float32)
        mean = 0.02 * jnp.arange(cout, dtype=jnp.float32)
        var = 1.0 + 0.03 * jnp.arange(cout, dtype=jnp.float32)
        scale = gamma / jnp.sqrt(var + eps)
        Ws.append(scale[:, None] * w)                               # (Cout, Cin)
        bs.append((beta - scale * mean)[:, None])                   # (Cout, 1)
    return Ws, bs


# ----------------------------------------------------------------------------- reference

def sa_mlp_pool_ref(grouped, cnt_mask, Ws, bs):
    """Pure-JAX reference mirroring the kernel's bf16/f32 mixed precision.

    grouped: (B, Pt, Cin_pad, S, TP) bf16, cnt_mask: (B, 1, Ppad) -> (B, Cout, Ppad) f32
    """
    B, Pt, Cin, S, TP = grouped.shape
    h = grouped
    L = len(Ws)
    for l, (w, bia) in enumerate(zip(Ws, bs)):
        wk = w
        if l == 0 and wk.shape[1] < Cin:
            wk = jnp.pad(wk, ((0, 0), (0, Cin - wk.shape[1])))
        y = jnp.einsum("oi,bpisn->bposn", wk.astype(jnp.bfloat16), h,
                       preferred_element_type=jnp.float32)
        y = y + bia.reshape(1, 1, -1, 1, 1)
        y = jnp.maximum(y, 0.0)
        h = y.astype(jnp.bfloat16) if l + 1 < L else y
    pooled = jnp.max(h, axis=3)                                   # (B, Pt, Cout, TP)
    pooled = jnp.transpose(pooled, (0, 2, 1, 3)).reshape(B, -1, Pt * TP)
    return pooled * cnt_mask


# ----------------------------------------------------------------------------- main

if __name__ == "__main__":
    key = jax.random.PRNGKey(0)
    B, N, C = 2, 64, 5           # batch, #points, feature channels
    npoint = 16                  # grouping centers
    Cin = 3 + C                  # use_xyz=True

    k_xyz, k_feat, k_p1, k_p2 = jax.random.split(key, 4)
    xyz = jax.random.uniform(k_xyz, (B, N, 3), jnp.float32)          # (B, N, 3)
    features = jax.random.normal(k_feat, (B, C, N), jnp.float32)     # (B, C, N)

    # two groupers / mlps (multi-scale grouping): (radius, nsample), mlp channel lists
    grouper_cfgs = [(0.4, 8), (0.8, 16)]
    mlp_channels = [[Cin, 16, 32], [Cin, 16, 64]]
    mlp_params = [make_fused_mlp_params(k, ch) for k, ch in zip([k_p1, k_p2], mlp_channels)]

    fwd = jax.jit(functools.partial(
        pointnet_sa_forward, npoint=npoint, grouper_cfgs=grouper_cfgs, mlp_params=mlp_params))
    new_xyz, new_features = fwd(xyz, features)
    jax.block_until_ready((new_xyz, new_features))

    assert new_xyz.shape == (B, npoint, 3)
    assert new_features.shape == (B, 32 + 64, npoint)

    # correctness check of the Pallas hot path against a pure-JAX reference (same bf16 quantization)
    fps_idx = farthest_point_sample(xyz, npoint)
    nx = jax.vmap(lambda p, i: p[i])(xyz, fps_idx)
    Ppad = ((npoint + 127) // 128) * 128
    nx_pad = jnp.pad(nx, ((0, 0), (0, Ppad - npoint), (0, 0)))
    ref_outs = []
    for (radius, nsample), (Ws, bs) in zip(grouper_cfgs, mlp_params):
        cin_pad = ((Ws[0].shape[1] + 15) // 16) * 16
        couts = [int(w.shape[0]) for w in Ws]
        tp = _choose_tp(Ppad, nsample, cin_pad, couts, B)
        grouped, cnt_mask = _prepare_group(xyz, features, nx_pad, radius, nsample, tp, cin_pad)
        ref_outs.append(sa_mlp_pool_ref(grouped, cnt_mask, Ws, bs))
    ref = jnp.concatenate(ref_outs, axis=1)[:, :, :npoint]
    np.testing.assert_allclose(np.asarray(new_features), np.asarray(ref), rtol=2e-2, atol=2e-2)

    print("KERNEL_OK")
</pallas_src>

<mosaic_0001>
module attributes {stable_mosaic.version = 11 : i64} {
  func.func @kernel(%arg0: i32, %arg1: i32, %arg2: memref<1x1x16x1024xbf16, #tpu.memory_space<vmem>>, %arg3: memref<1x1x128xf32, #tpu.memory_space<vmem>>, %arg4: memref<16x16xbf16, #tpu.memory_space<vmem>>, %arg5: memref<16x1xf32, #tpu.memory_space<vmem>>, %arg6: memref<32x16xbf16, #tpu.memory_space<vmem>>, %arg7: memref<32x1xf32, #tpu.memory_space<vmem>>, %arg8: memref<1x32x128xf32, #tpu.memory_space<vmem>>) attributes {dimension_semantics = [#tpu.dimension_semantics<parallel>, #tpu.dimension_semantics<parallel>], iteration_bounds = array<i64: 2, 1>, scalar_prefetch = 0 : i64, scratch_operands = 0 : i64, tpu.core_type = #tpu.core_type<tc>, window_params = [{transform_indices = @transform_0, window_bounds = array<i64: 1, 1, 16, 1024>}, {transform_indices = @transform_1, window_bounds = array<i64: 1, 1, 128>}, {pipeline_mode = #tpu.pipeline_mode<synchronous>, transform_indices = @transform_2, window_bounds = array<i64: 16, 16>}, {pipeline_mode = #tpu.pipeline_mode<synchronous>, transform_indices = @transform_3, window_bounds = array<i64: 16, 1>}, {pipeline_mode = #tpu.pipeline_mode<synchronous>, transform_indices = @transform_4, window_bounds = array<i64: 32, 16>}, {pipeline_mode = #tpu.pipeline_mode<synchronous>, transform_indices = @transform_5, window_bounds = array<i64: 32, 1>}, {transform_indices = @transform_6, window_bounds = array<i64: 1, 32, 128>}]} {
    %c0 = arith.constant 0 : index
    %c0_0 = arith.constant 0 : index
    %c0_1 = arith.constant 0 : index
    %c0_2 = arith.constant 0 : index
    %0 = vector.load %arg2[%c0, %c0_0, %c0_1, %c0_2] : memref<1x1x16x1024xbf16, #tpu.memory_space<vmem>>, vector<1x1x16x1024xbf16>
    %1 = vector.shape_cast %0 : vector<1x1x16x1024xbf16> to vector<16x1024xbf16>
    %c0_3 = arith.constant 0 : index
    %c0_4 = arith.constant 0 : index
    %2 = vector.load %arg4[%c0_3, %c0_4] : memref<16x16xbf16, #tpu.memory_space<vmem>>, vector<16x16xbf16>
    %c0_5 = arith.constant 0 : index
    %c0_6 = arith.constant 0 : index
    %3 = vector.load %arg5[%c0_5, %c0_6] : memref<16x1xf32, #tpu.memory_space<vmem>>, vector<16x1xf32>
    %cst = arith.constant dense<0.000000e+00> : vector<16x1024xf32>
    %4 = tpu.matmul %2, %1, %cst {dimension_numbers = #tpu.dot_dimension_numbers<[1], [0], [0], [1], [0, 0, 1, 1], [], []>} : vector<16x16xbf16>, vector<16x1024xbf16>, vector<16x1024xf32> -> vector<16x1024xf32>
    %5 = vector.broadcast %3 : vector<16x1xf32> to vector<16x1024xf32>
    %6 = arith.addf %4, %5 : vector<16x1024xf32>
    %cst_7 = arith.constant 0.000000e+00 : f32
    %7 = vector.broadcast %cst_7 : f32 to vector<16x1024xf32>
    %8 = arith.maximumf %6, %7 : vector<16x1024xf32>
    %9 = arith.truncf %8 : vector<16x1024xf32> to vector<16x1024xbf16>
    %c0_8 = arith.constant 0 : index
    %c0_9 = arith.constant 0 : index
    %10 = vector.load %arg6[%c0_8, %c0_9] : memref<32x16xbf16, #tpu.memory_space<vmem>>, vector<32x16xbf16>
    %c0_10 = arith.constant 0 : index
    %c0_11 = arith.constant 0 : index
    %11 = vector.load %arg7[%c0_10, %c0_11] : memref<32x1xf32, #tpu.memory_space<vmem>>, vector<32x1xf32>
    %cst_12 = arith.constant dense<0.000000e+00> : vector<32x1024xf32>
    %12 = tpu.matmul %10, %9, %cst_12 {dimension_numbers = #tpu.dot_dimension_numbers<[1], [0], [0], [1], [0, 0, 1, 1], [], []>} : vector<32x16xbf16>, vector<16x1024xbf16>, vector<32x1024xf32> -> vector<32x1024xf32>
    %13 = vector.broadcast %11 : vector<32x1xf32> to vector<32x1024xf32>
    %14 = arith.addf %12, %13 : vector<32x1024xf32>
    %cst_13 = arith.constant 0.000000e+00 : f32
    %15 = vector.broadcast %cst_13 : f32 to vector<32x1024xf32>
    %16 = arith.maximumf %14, %15 : vector<32x1024xf32>
    %17 = vector.extract_strided_slice %16 {offsets = [0, 0], sizes = [32, 128], strides = [1, 1]} : vector<32x1024xf32> to vector<32x128xf32>
    %18 = vector.extract_strided_slice %16 {offsets = [0, 128], sizes = [32, 128], strides = [1, 1]} : vector<32x1024xf32> to vector<32x128xf32>
    %19 = vector.extract_strided_slice %16 {offsets = [0, 256], sizes = [32, 128], strides = [1, 1]} : vector<32x1024xf32> to vector<32x128xf32>
    %20 = vector.extract_strided_slice %16 {offsets = [0, 384], sizes = [32, 128], strides = [1, 1]} : vector<32x1024xf32> to vector<32x128xf32>
    %21 = vector.extract_strided_slice %16 {offsets = [0, 512], sizes = [32, 128], strides = [1, 1]} : vector<32x1024xf32> to vector<32x128xf32>
    %22 = vector.extract_strided_slice %16 {offsets = [0, 640], sizes = [32, 128], strides = [1, 1]} : vector<32x1024xf32> to vector<32x128xf32>
    %23 = vector.extract_strided_slice %16 {offsets = [0, 768], sizes = [32, 128], strides = [1, 1]} : vector<32x1024xf32> to vector<32x128xf32>
    %24 = vector.extract_strided_slice %16 {offsets = [0, 896], sizes = [32, 128], strides = [1, 1]} : vector<32x1024xf32> to vector<32x128xf32>
    %25 = arith.maximumf %17, %18 : vector<32x128xf32>
    %26 = arith.maximumf %19, %20 : vector<32x128xf32>
    %27 = arith.maximumf %21, %22 : vector<32x128xf32>
    %28 = arith.maximumf %23, %24 : vector<32x128xf32>
    %29 = arith.maximumf %25, %26 : vector<32x128xf32>
    %30 = arith.maximumf %27, %28 : vector<32x128xf32>
    %31 = arith.maximumf %29, %30 : vector<32x128xf32>
    %c0_14 = arith.constant 0 : index
    %c0_15 = arith.constant 0 : index
    %c0_16 = arith.constant 0 : index
    %32 = vector.load %arg3[%c0_14, %c0_15, %c0_16] : memref<1x1x128xf32, #tpu.memory_space<vmem>>, vector<1x1x128xf32>
    %33 = vector.shape_cast %32 : vector<1x1x128xf32> to vector<1x128xf32>
    %34 = vector.broadcast %33 : vector<1x128xf32> to vector<32x128xf32>
    %35 = arith.mulf %31, %34 : vector<32x128xf32>
    %c0_17 = arith.constant 0 : index
    %c0_18 = arith.constant 0 : index
    %c0_19 = arith.constant 0 : index
    %36 = vector.load %arg8[%c0_17, %c0_18, %c0_19] : memref<1x32x128xf32, #tpu.memory_space<vmem>>, vector<1x32x128xf32>
    %37 = vector.shape_cast %36 : vector<1x32x128xf32> to vector<32x128xf32>
    %38 = vector.shape_cast %35 : vector<32x128xf32> to vector<1x32x128xf32>
    tpu.vector_store %arg8[%c0_17, %c0_18, %c0_19], %38 {strides = array<i32>} : memref<1x32x128xf32, #tpu.memory_space<vmem>>, vector<1x32x128xf32>,
    return
  }
  func.func @transform_0(%arg0: i32, %arg1: i32) -> (i32, i32, i32, i32) {
    %c0_i32 = arith.constant 0 : i32
    %c0_i32_0 = arith.constant 0 : i32
    %c0_i32_1 = arith.constant 0 : i32
    return %arg0, %arg1, %c0_i32, %c0_i32_0 : i32, i32, i32, i32
  }
  func.func @transform_1(%arg0: i32, %arg1: i32) -> (i32, i32, i32) {
    %c0_i32 = arith.constant 0 : i32
    %c0_i32_0 = arith.constant 0 : i32
    return %arg0, %c0_i32, %arg1 : i32, i32, i32
  }
  func.func @transform_2(%arg0: i32, %arg1: i32) -> (i32, i32) {
    %c0_i32 = arith.constant 0 : i32
    %c0_i32_0 = arith.constant 0 : i32
    %c0_i32_1 = arith.constant 0 : i32
    return %c0_i32, %c0_i32_0 : i32, i32
  }
  func.func @transform_3(%arg0: i32, %arg1: i32) -> (i32, i32) {
    %c0_i32 = arith.constant 0 : i32
    %c0_i32_0 = arith.constant 0 : i32
    %c0_i32_1 = arith.constant 0 : i32
    return %c0_i32, %c0_i32_0 : i32, i32
  }
  func.func @transform_4(%arg0: i32, %arg1: i32) -> (i32, i32) {
    %c0_i32 = arith.constant 0 : i32
    %c0_i32_0 = arith.constant 0 : i32
    %c0_i32_1 = arith.constant 0 : i32
    return %c0_i32, %c0_i32_0 : i32, i32
  }
  func.func @transform_5(%arg0: i32, %arg1: i32) -> (i32, i32) {
    %c0_i32 = arith.constant 0 : i32
    %c0_i32_0 = arith.constant 0 : i32
    %c0_i32_1 = arith.constant 0 : i32
    return %c0_i32, %c0_i32_0 : i32, i32
  }
  func.func @transform_6(%arg0: i32, %arg1: i32) -> (i32, i32, i32) {
    %c0_i32 = arith.constant 0 : i32
    %c0_i32_0 = arith.constant 0 : i32
    return %arg0, %c0_i32, %arg1 : i32, i32, i32
  }
}

module attributes {stable_mosaic.version = 11 : i64} {
  func.func @kernel(%arg0: i32, %arg1: i32, %arg2: memref<1x1x16x2048xbf16, #tpu.memory_space<vmem>>, %arg3: memref<1x1x128xf32, #tpu.memory_space<vmem>>, %arg4: memref<16x16xbf16, #tpu.memory_space<vmem>>, %arg5: memref<16x1xf32, #tpu.memory_space<vmem>>, %arg6: memref<64x16xbf16, #tpu.memory_space<vmem>>, %arg7: memref<64x1xf32, #tpu.memory_space<vmem>>, %arg8: memref<1x64x128xf32, #tpu.memory_space<vmem>>) attributes {dimension_semantics = [#tpu.dimension_semantics<parallel>, #tpu.dimension_semantics<parallel>], iteration_bounds = array<i64: 2, 1>, scalar_prefetch = 0 : i64, scratch_operands = 0 : i64, tpu.core_type = #tpu.core_type<tc>, window_params = [{transform_indices = @transform_0, window_bounds = array<i64: 1, 1, 16, 2048>}, {transform_indices = @transform_1, window_bounds = array<i64: 1, 1, 128>}, {pipeline_mode = #tpu.pipeline_mode<synchronous>, transform_indices = @transform_2, window_bounds = array<i64: 16, 16>}, {pipeline_mode = #tpu.pipeline_mode<synchronous>, transform_indices = @transform_3, window_bounds = array<i64: 16, 1>}, {pipeline_mode = #tpu.pipeline_mode<synchronous>, transform_indices = @transform_4, window_bounds = array<i64: 64, 16>}, {pipeline_mode = #tpu.pipeline_mode<synchronous>, transform_indices = @transform_5, window_bounds = array<i64: 64, 1>}, {transform_indices = @transform_6, window_bounds = array<i64: 1, 64, 128>}]} {
    %c0 = arith.constant 0 : index
    %c0_0 = arith.constant 0 : index
    %c0_1 = arith.constant 0 : index
    %c0_2 = arith.constant 0 : index
    %0 = vector.load %arg2[%c0, %c0_0, %c0_1, %c0_2] : memref<1x1x16x2048xbf16, #tpu.memory_space<vmem>>, vector<1x1x16x2048xbf16>
    %1 = vector.shape_cast %0 : vector<1x1x16x2048xbf16> to vector<16x2048xbf16>
    %c0_3 = arith.constant 0 : index
    %c0_4 = arith.constant 0 : index
    %2 = vector.load %arg4[%c0_3, %c0_4] : memref<16x16xbf16, #tpu.memory_space<vmem>>, vector<16x16xbf16>
    %c0_5 = arith.constant 0 : index
    %c0_6 = arith.constant 0 : index
    %3 = vector.load %arg5[%c0_5, %c0_6] : memref<16x1xf32, #tpu.memory_space<vmem>>, vector<16x1xf32>
    %cst = arith.constant dense<0.000000e+00> : vector<16x2048xf32>
    %4 = tpu.matmul %2, %1, %cst {dimension_numbers = #tpu.dot_dimension_numbers<[1], [0], [0], [1], [0, 0, 1, 1], [], []>} : vector<16x16xbf16>, vector<16x2048xbf16>, vector<16x2048xf32> -> vector<16x2048xf32>
    %5 = vector.broadcast %3 : vector<16x1xf32> to vector<16x2048xf32>
    %6 = arith.addf %4, %5 : vector<16x2048xf32>
    %cst_7 = arith.constant 0.000000e+00 : f32
    %7 = vector.broadcast %cst_7 : f32 to vector<16x2048xf32>
    %8 = arith.maximumf %6, %7 : vector<16x2048xf32>
    %9 = arith.truncf %8 : vector<16x2048xf32> to vector<16x2048xbf16>
    %c0_8 = arith.constant 0 : index
    %c0_9 = arith.constant 0 : index
    %10 = vector.load %arg6[%c0_8, %c0_9] : memref<64x16xbf16, #tpu.memory_space<vmem>>, vector<64x16xbf16>
    %c0_10 = arith.constant 0 : index
    %c0_11 = arith.constant 0 : index
    %11 = vector.load %arg7[%c0_10, %c0_11] : memref<64x1xf32, #tpu.memory_space<vmem>>, vector<64x1xf32>
    %cst_12 = arith.constant dense<0.000000e+00> : vector<64x2048xf32>
    %12 = tpu.matmul %10, %9, %cst_12 {dimension_numbers = #tpu.dot_dimension_numbers<[1], [0], [0], [1], [0, 0, 1, 1], [], []>} : vector<64x16xbf16>, vector<16x2048xbf16>, vector<64x2048xf32> -> vector<64x2048xf32>
    %13 = vector.broadcast %11 : vector<64x1xf32> to vector<64x2048xf32>
    %14 = arith.addf %12, %13 : vector<64x2048xf32>
    %cst_13 = arith.constant 0.000000e+00 : f32
    %15 = vector.broadcast %cst_13 : f32 to vector<64x2048xf32>
    %16 = arith.maximumf %14, %15 : vector<64x2048xf32>
    %17 = vector.extract_strided_slice %16 {offsets = [0, 0], sizes = [64, 128], strides = [1, 1]} : vector<64x2048xf32> to vector<64x128xf32>
    %18 = vector.extract_strided_slice %16 {offsets = [0, 128], sizes = [64, 128], strides = [1, 1]} : vector<64x2048xf32> to vector<64x128xf32>
    %19 = vector.extract_strided_slice %16 {offsets = [0, 256], sizes = [64, 128], strides = [1, 1]} : vector<64x2048xf32> to vector<64x128xf32>
    %20 = vector.extract_strided_slice %16 {offsets = [0, 384], sizes = [64, 128], strides = [1, 1]} : vector<64x2048xf32> to vector<64x128xf32>
    %21 = vector.extract_strided_slice %16 {offsets = [0, 512], sizes = [64, 128], strides = [1, 1]} : vector<64x2048xf32> to vector<64x128xf32>
    %22 = vector.extract_strided_slice %16 {offsets = [0, 640], sizes = [64, 128], strides = [1, 1]} : vector<64x2048xf32> to vector<64x128xf32>
    %23 = vector.extract_strided_slice %16 {offsets = [0, 768], sizes = [64, 128], strides = [1, 1]} : vector<64x2048xf32> to vector<64x128xf32>
    %24 = vector.extract_strided_slice %16 {offsets = [0, 896], sizes = [64, 128], strides = [1, 1]} : vector<64x2048xf32> to vector<64x128xf32>
    %25 = vector.extract_strided_slice %16 {offsets = [0, 1024], sizes = [64, 128], strides = [1, 1]} : vector<64x2048xf32> to vector<64x128xf32>
    %26 = vector.extract_strided_slice %16 {offsets = [0, 1152], sizes = [64, 128], strides = [1, 1]} : vector<64x2048xf32> to vector<64x128xf32>
    %27 = vector.extract_strided_slice %16 {offsets = [0, 1280], sizes = [64, 128], strides = [1, 1]} : vector<64x2048xf32> to vector<64x128xf32>
    %28 = vector.extract_strided_slice %16 {offsets = [0, 1408], sizes = [64, 128], strides = [1, 1]} : vector<64x2048xf32> to vector<64x128xf32>
    %29 = vector.extract_strided_slice %16 {offsets = [0, 1536], sizes = [64, 128], strides = [1, 1]} : vector<64x2048xf32> to vector<64x128xf32>
    %30 = vector.extract_strided_slice %16 {offsets = [0, 1664], sizes = [64, 128], strides = [1, 1]} : vector<64x2048xf32> to vector<64x128xf32>
    %31 = vector.extract_strided_slice %16 {offsets = [0, 1792], sizes = [64, 128], strides = [1, 1]} : vector<64x2048xf32> to vector<64x128xf32>
    %32 = vector.extract_strided_slice %16 {offsets = [0, 1920], sizes = [64, 128], strides = [1, 1]} : vector<64x2048xf32> to vector<64x128xf32>
    %33 = arith.maximumf %17, %18 : vector<64x128xf32>
    %34 = arith.maximumf %19, %20 : vector<64x128xf32>
    %35 = arith.maximumf %21, %22 : vector<64x128xf32>
    %36 = arith.maximumf %23, %24 : vector<64x128xf32>
    %37 = arith.maximumf %25, %26 : vector<64x128xf32>
    %38 = arith.maximumf %27, %28 : vector<64x128xf32>
    %39 = arith.maximumf %29, %30 : vector<64x128xf32>
    %40 = arith.maximumf %31, %32 : vector<64x128xf32>
    %41 = arith.maximumf %33, %34 : vector<64x128xf32>
    %42 = arith.maximumf %35, %36 : vector<64x128xf32>
    %43 = arith.maximumf %37, %38 : vector<64x128xf32>
    %44 = arith.maximumf %39, %40 : vector<64x128xf32>
    %45 = arith.maximumf %41, %42 : vector<64x128xf32>
    %46 = arith.maximumf %43, %44 : vector<64x128xf32>
    %47 = arith.maximumf %45, %46 : vector<64x128xf32>
    %c0_14 = arith.constant 0 : index
    %c0_15 = arith.constant 0 : index
    %c0_16 = arith.constant 0 : index
    %48 = vector.load %arg3[%c0_14, %c0_15, %c0_16] : memref<1x1x128xf32, #tpu.memory_space<vmem>>, vector<1x1x128xf32>
    %49 = vector.shape_cast %48 : vector<1x1x128xf32> to vector<1x128xf32>
    %50 = vector.broadcast %49 : vector<1x128xf32> to vector<64x128xf32>
    %51 = arith.mulf %47, %50 : vector<64x128xf32>
    %c0_17 = arith.constant 0 : index
    %c0_18 = arith.constant 0 : index
    %c0_19 = arith.constant 0 : index
    %52 = vector.load %arg8[%c0_17, %c0_18, %c0_19] : memref<1x64x128xf32, #tpu.memory_space<vmem>>, vector<1x64x128xf32>
    %53 = vector.shape_cast %52 : vector<1x64x128xf32> to vector<64x128xf32>
    %54 = vector.shape_cast %51 : vector<64x128xf32> to vector<1x64x128xf32>
    tpu.vector_store %arg8[%c0_17, %c0_18, %c0_19], %54 {strides = array<i32>} : memref<1x64x128xf32, #tpu.memory_space<vmem>>, vector<1x64x128xf32>,
    return
  }
  func.func @transform_0(%arg0: i32, %arg1: i32) -> (i32, i32, i32, i32) {
    %c0_i32 = arith.constant 0 : i32
    %c0_i32_0 = arith.constant 0 : i32
    %c0_i32_1 = arith.constant 0 : i32
    return %arg0, %arg1, %c0_i32, %c0_i32_0 : i32, i32, i32, i32
  }
  func.func @transform_1(%arg0: i32, %arg1: i32) -> (i32, i32, i32) {
    %c0_i32 = arith.constant 0 : i32
    %c0_i32_0 = arith.constant 0 : i32
    return %arg0, %c0_i32, %arg1 : i32, i32, i32
  }
  func.func @transform_2(%arg0: i32, %arg1: i32) -> (i32, i32) {
    %c0_i32 = arith.constant 0 : i32
    %c0_i32_0 = arith.constant 0 : i32
    %c0_i32_1 = arith.constant 0 : i32
    return %c0_i32, %c0_i32_0 : i32, i32
  }
  func.func @transform_3(%arg0: i32, %arg1: i32) -> (i32, i32) {
    %c0_i32 = arith.constant 0 : i32
    %c0_i32_0 = arith.constant 0 : i32
    %c0_i32_1 = arith.constant 0 : i32
    return %c0_i32, %c0_i32_0 : i32, i32
  }
  func.func @transform_4(%arg0: i32, %arg1: i32) -> (i32, i32) {
    %c0_i32 = arith.constant 0 : i32
    %c0_i32_0 = arith.constant 0 : i32
    %c0_i32_1 = arith.constant 0 : i32
    return %c0_i32, %c0_i32_0 : i32, i32
  }
  func.func @transform_5(%arg0: i32, %arg1: i32) -> (i32, i32) {
    %c0_i32 = arith.constant 0 : i32
    %c0_i32_0 = arith.constant 0 : i32
    %c0_i32_1 = arith.constant 0 : i32
    return %c0_i32, %c0_i32_0 : i32, i32
  }
  func.func @transform_6(%arg0: i32, %arg1: i32) -> (i32, i32, i32) {
    %c0_i32 = arith.constant 0 : i32
    %c0_i32_0 = arith.constant 0 : i32
    return %arg0, %c0_i32, %arg1 : i32, i32, i32
  }
}

</mosaic_0001>

<llo_original>
// kernel: custom-call.12
$region0: #{custom-call.12}
  %s0 = inlined_call_operand.vmem [shape: f32[2,64], index: 0, kind: output, shape index: {}]

// kernel: custom-call.16
$region0: #{custom-call.16}
  %s0 = inlined_call_operand.vmem [shape: s32[2,16], index: 0, kind: output, shape index: {}]

// kernel: pointnet_sa_forward.2
$region0: #{pointnet_sa_forward.2}
  #allocation0 [shape = 'u32[]', space=smem, size = 0x4, offset = 0x4, fixed_abs, tag = 'smem constant byte address 0x4 - core index']
  #allocation1 [shape = 'u32[144,128]{1,0:T(1,128)}', space=vmem, size = 0x12000, scoped, tag = 'internal scratch']
  %s0 = inlined_call_operand.vmem [shape: bf16[2,1,16,1024], index: 0, kind: input, shape index: {}]
  %s1 = inlined_call_operand.vmem [shape: f32[2,1,128], index: 1, kind: input, shape index: {}]
  %s2 = inlined_call_operand.vmem [shape: bf16[16,16], index: 2, kind: input, shape index: {}]
  %s3 = inlined_call_operand.vmem [shape: f32[16,1], index: 3, kind: input, shape index: {}]
  %s4 = inlined_call_operand.vmem [shape: bf16[32,16], index: 4, kind: input, shape index: {}]
  %s5 = inlined_call_operand.vmem [shape: f32[32,1], index: 5, kind: input, shape index: {}]
  %s6 = inlined_call_operand.vmem [shape: f32[2,32,128], index: 6, kind: output, shape index: {}]
  %s7 = sld [smem:[#allocation0]]
  $region57: #{pointnet_sa_forward.2} parent=0
    _
  %s9 = ssub.s32 1, %s7
  %s10 = scalar_select 0, %s9, %s7
  loop: start=0, step=1, limit=4
  $region2: #{pointnet_sa_forward.2} parent=0 // loop_pre_header
    _
  $region3: #{pointnet_sa_forward.2} parent=0 // loop_header
    %s12 = sphi 0, %s16
    %p13 = scmp.ge.s32.totalorder %s12, 4
    %s19 = sphi 0, %s31
    %s20 = sphi 0, %s27
    %s21 = sphi 0, %s19
    %s22 = sphi 0, %s20
    %s23 = sphi 0, %s21
    %s24 = sphi 0, %s22
    %s36 = sphi 0, %s38
    %s39 = sphi 0, %s36
    %s40 = sphi 0, %s39
    %s56 = sphi 0, %s40
    %s64 = sphi 0, %s66
    %s67 = sphi 0, %s64
    %s68 = sphi 0, %s67
    %s84 = sphi 0, %s68
    %s88 = sphi 0, %s88
    %s90 = sphi 0, %s88
    %s91 = sphi 0, %s90
    %s105 = sphi 0, %s91
    %s109 = sphi 0, %s109
    %s111 = sphi 0, %s109
    %s112 = sphi 0, %s111
    %s126 = sphi 0, %s112
    %s130 = sphi 0, %s130
    %s132 = sphi 0, %s130
    %s133 = sphi 0, %s132
    %s147 = sphi 0, %s133
    %s151 = sphi 0, %s151
    %s153 = sphi 0, %s151
    %s154 = sphi 0, %s153
    %s168 = sphi 0, %s154
    %s176 = sphi 0, %s178
    %s179 = sphi 0, %s176
    %s180 = sphi 0, %s179
    %s196 = sphi 0, %s180
  $region4: #{pointnet_sa_forward.2} parent=0 // loop_header_branch
    %15 = sbr.rel (%p13) target = $region8
  $region5: #{pointnet_sa_forward.2} parent=0 // loop_body
    %s17 = ssub.s32 %s12, 1
    %s18 = ssub.s32 %s12, 2
    %s25 = sadd.s32 1, %s20
    %p26 = scmp.ge.s32.totalorder %s25, 1
    %s27 = scalar_select %p26, 0, %s25
    %s28 = sadd.s32 1, %s19
    %s29 = scalar_select %p26, %s28, %s19
    %p30 = scmp.ge.s32.totalorder %s29, 2
    %s31 = scalar_select %p30, 0, %s29
    %s32 = ssub.s32 %s19, %s31
    %s33 = ssub.s32 %s20, %s27
    %s34 = sor.u32 %s32, %s33
    %p35 = scmp.eq.s32.totalorder %s34, 0
    %s37 = sadd.s32 %s36, 1
    %s38 = scalar_select %p35, %s36, %s37
    %p41 = pneg %p35
    %p42 = scmp.eq.s32.totalorder %s12, 1
    %p43 = por %p41, %p42
    %p44 = scmp.ne.s32.totalorder %s36, %s39
    %p45 = scmp.eq.s32.totalorder %s12, 0
    %p46 = por %p44, %p45
    %p47 = scmp.ne.s32.totalorder %s36, %s39
    %p48 = scmp.eq.s32.totalorder %s17, 1
    %p49 = por %p47, %p48
    %p50 = scmp.ne.s32.totalorder %s39, %s40
    %p51 = scmp.eq.s32.totalorder %s17, 0
    %p52 = por %p50, %p51
    %p53 = scmp.ne.s32.totalorder %s39, %s40
    %p54 = scmp.eq.s32.totalorder %s18, 1
    %p55 = por %p53, %p54
    %p57 = scmp.ne.s32.totalorder %s40, %s56
    %p58 = scmp.eq.s32.totalorder %s18, 0
    %p59 = por %p57, %p58
    %s60 = ssub.s32 %s19, %s31
    %s61 = ssub.s32 %s20, %s27
    %s62 = sor.u32 %s60, %s61
    %p63 = scmp.eq.s32.totalorder %s62, 0
    %s65 = sadd.s32 %s64, 1
    %s66 = scalar_select %p63, %s64, %s65
    %p69 = pneg %p63
    %p70 = scmp.eq.s32.totalorder %s12, 1
    %p71 = por %p69, %p70
    %p72 = scmp.ne.s32.totalorder %s64, %s67
    %p73 = scmp.eq.s32.totalorder %s12, 0
    %p74 = por %p72, %p73
    %p75 = scmp.ne.s32.totalorder %s64, %s67
    %p76 = scmp.eq.s32.totalorder %s17, 1
    %p77 = por %p75, %p76
    %p78 = scmp.ne.s32.totalorder %s67, %s68
    %p79 = scmp.eq.s32.totalorder %s17, 0
    %p80 = por %p78, %p79
    %p81 = scmp.ne.s32.totalorder %s67, %s68
    %p82 = scmp.eq.s32.totalorder %s18, 1
    %p83 = por %p81, %p82
    %p85 = scmp.ne.s32.totalorder %s68, %s84
    %p86 = scmp.eq.s32.totalorder %s18, 0
    %p87 = por %p85, %p86
    %s89 = sadd.s32 %s88, 1
    %p92 = scmp.eq.s32.totalorder %s12, 1
    %p93 = scmp.ne.s32.totalorder %s88, %s90
    %p94 = scmp.eq.s32.totalorder %s12, 0
    %p95 = por %p93, %p94
    %p96 = scmp.ne.s32.totalorder %s88, %s90
    %p97 = scmp.eq.s32.totalorder %s17, 1
    %p98 = por %p96, %p97
    %p99 = scmp.ne.s32.totalorder %s90, %s91
    %p100 = scmp.eq.s32.totalorder %s17, 0
    %p101 = por %p99, %p100
    %p102 = scmp.ne.s32.totalorder %s90, %s91
    %p103 = scmp.eq.s32.totalorder %s18, 1
    %p104 = por %p102, %p103
    %p106 = scmp.ne.s32.totalorder %s91, %s105
    %p107 = scmp.eq.s32.totalorder %s18, 0
    %p108 = por %p106, %p107
    %s110 = sadd.s32 %s109, 1
    %p113 = scmp.eq.s32.totalorder %s12, 1
    %p114 = scmp.ne.s32.totalorder %s109, %s111
    %p115 = scmp.eq.s32.totalorder %s12, 0
    %p116 = por %p114, %p115
    %p117 = scmp.ne.s32.totalorder %s109, %s111
    %p118 = scmp.eq.s32.totalorder %s17, 1
    %p119 = por %p117, %p118
    %p120 = scmp.ne.s32.totalorder %s111, %s112
    %p121 = scmp.eq.s32.totalorder %s17, 0
    %p122 = por %p120, %p121
    %p123 = scmp.ne.s32.totalorder %s111, %s112
    %p124 = scmp.eq.s32.totalorder %s18, 1
    %p125 = por %p123, %p124
    %p127 = scmp.ne.s32.totalorder %s112, %s126
    %p128 = scmp.eq.s32.totalorder %s18, 0
    %p129 = por %p127, %p128
    %s131 = sadd.s32 %s130, 1
    %p134 = scmp.eq.s32.totalorder %s12, 1
    %p135 = scmp.ne.s32.totalorder %s130, %s132
    %p136 = scmp.eq.s32.totalorder %s12, 0
    %p137 = por %p135, %p136
    %p138 = scmp.ne.s32.totalorder %s130, %s132
    %p139 = scmp.eq.s32.totalorder %s17, 1
    %p140 = por %p138, %p139
    %p141 = scmp.ne.s32.totalorder %s132, %s133
    %p142 = scmp.eq.s32.totalorder %s17, 0
    %p143 = por %p141, %p142
    %p144 = scmp.ne.s32.totalorder %s132, %s133
    %p145 = scmp.eq.s32.totalorder %s18, 1
    %p146 = por %p144, %p145
    %p148 = scmp.ne.s32.totalorder %s133, %s147
    %p149 = scmp.eq.s32.totalorder %s18, 0
    %p150 = por %p148, %p149
    %s152 = sadd.s32 %s151, 1
    %p155 = scmp.eq.s32.totalorder %s12, 1
    %p156 = scmp.ne.s32.totalorder %s151, %s153
    %p157 = scmp.eq.s32.totalorder %s12, 0
    %p158 = por %p156, %p157
    %p159 = scmp.ne.s32.totalorder %s151, %s153
    %p160 = scmp.eq.s32.totalorder %s17, 1
    %p161 = por %p159, %p160
    %p162 = scmp.ne.s32.totalorder %s153, %s154
    %p163 = scmp.eq.s32.totalorder %s17, 0
    %p164 = por %p162, %p163
    %p165 = scmp.ne.s32.totalorder %s153, %s154
    %p166 = scmp.eq.s32.totalorder %s18, 1
    %p167 = por %p165, %p166
    %p169 = scmp.ne.s32.totalorder %s154, %s168
    %p170 = scmp.eq.s32.totalorder %s18, 0
    %p171 = por %p169, %p170
    %s172 = ssub.s32 %s19, %s31
    %s173 = ssub.s32 %s20, %s27
    %s174 = sor.u32 %s172, %s173
    %p175 = scmp.eq.s32.totalorder %s174, 0
    %s177 = sadd.s32 %s176, 1
    %s178 = scalar_select %p175, %s176, %s177
    %p181 = pneg %p175
    %p182 = scmp.eq.s32.totalorder %s12, 1
    %p183 = por %p181, %p182
    %p184 = scmp.ne.s32.totalorder %s176, %s179
    %p185 = scmp.eq.s32.totalorder %s12, 0
    %p186 = por %p184, %p185
    %p187 = scmp.ne.s32.totalorder %s176, %s179
    %p188 = scmp.eq.s32.totalorder %s17, 1
    %p189 = por %p187, %p188
    %p190 = scmp.ne.s32.totalorder %s179, %s180
    %p191 = scmp.eq.s32.totalorder %s17, 0
    %p192 = por %p190, %p191
    %p193 = scmp.ne.s32.totalorder %s179, %s180
    %p194 = scmp.eq.s32.totalorder %s18, 1
    %p195 = por %p193, %p194
    %p197 = scmp.ne.s32.totalorder %s180, %s196
    %p198 = scmp.eq.s32.totalorder %s18, 0
    %p199 = por %p197, %p198
    %p200 = scmp.le.s32.totalorder 1, %s12
    %p201 = scmp.lt.s32.totalorder %s12, 3
    %p202 = pnand %p200, %p201
    %p203 = pneg %p202
    // Predicated region
    $region9: #{pointnet_sa_forward.2} parent=5 // pred_check
      _
    $region10: #{pointnet_sa_forward.2} parent=5 // pred_check_branch
      %205 = sbr.rel (%p202) target = $region12
    $region11: #{pointnet_sa_forward.2} parent=5 // pred_region
      %s206 = ssub.s32 %s12, 1
      // Predicated region
      $region13: #{pointnet_sa_forward.2} parent=11 // pred_check
        %p207 = pneg %p101
      $region14: #{pointnet_sa_forward.2} parent=11 // pred_check_branch
        %209 = sbr.rel (%p207) target = $region16
      $region15: #{pointnet_sa_forward.2} parent=11 // pred_region
        _
      $region16: #{pointnet_sa_forward.2} parent=11 // pred_fallthru
        _
      // Predicated region
      $region17: #{pointnet_sa_forward.2} parent=11 // pred_check
        %p210 = pneg %p122
      $region18: #{pointnet_sa_forward.2} parent=11 // pred_check_branch
        %212 = sbr.rel (%p210) target = $region20
      $region19: #{pointnet_sa_forward.2} parent=11 // pred_region
        _
      $region20: #{pointnet_sa_forward.2} parent=11 // pred_fallthru
        _
      // Predicated region
      $region21: #{pointnet_sa_forward.2} parent=11 // pred_check
        %p213 = pneg %p143
      $region22: #{pointnet_sa_forward.2} parent=11 // pred_check_branch
        %215 = sbr.rel (%p213) target = $region24
      $region23: #{pointnet_sa_forward.2} parent=11 // pred_region
        _
      $region24: #{pointnet_sa_forward.2} parent=11 // pred_fallthru
        _
      // Predicated region
      $region25: #{pointnet_sa_forward.2} parent=11 // pred_check
        %p216 = pneg %p164
      $region26: #{pointnet_sa_forward.2} parent=11 // pred_check_branch
        %218 = sbr.rel (%p216) target = $region28
      $region27: #{pointnet_sa_forward.2} parent=11 // pred_region
        _
      $region28: #{pointnet_sa_forward.2} parent=11 // pred_fallthru
        _
    $region12: #{pointnet_sa_forward.2} parent=5 // pred_fallthru
      _
    %p219 = scmp.lt.s32.totalorder %s12, 2
    // Predicated region
    $region29: #{pointnet_sa_forward.2} parent=5 // pred_check
      %p220 = pneg %p219
    $region30: #{pointnet_sa_forward.2} parent=5 // pred_check_branch
      %222 = sbr.rel (%p220) target = $region32
    $region31: #{pointnet_sa_forward.2} parent=5 // pred_region
      // Predicated region
      $region33: #{pointnet_sa_forward.2} parent=31 // pred_check
        %p223 = pneg %p46
      $region34: #{pointnet_sa_forward.2} parent=31 // pred_check_branch
        %225 = sbr.rel (%p223) target = $region36
      $region35: #{pointnet_sa_forward.2} parent=31 // pred_region
        %p226 = scmp.lt.s32.totalorder %s19, 1
        %s227 = scalar_select %p226, %s19, 1
        %p228 = scmp.lt.s32.totalorder %s20, 0
        %s229 = scalar_select %p228, %s20, 0
        %s230 = smul.addr %s229, 16
        %s231 = smul.addr %s227, 16
        %s232 = sadd.s32 %s230, %s231
        %s233 = smul.addr %s232, 4
        %s234 = scalar_lea.vmem %s0, %s233
      $region36: #{pointnet_sa_forward.2} parent=31 // pred_fallthru
        _
      // Predicated region
      $region37: #{pointnet_sa_forward.2} parent=31 // pred_check
        %p235 = pneg %p74
      $region38: #{pointnet_sa_forward.2} parent=31 // pred_check_branch
        %237 = sbr.rel (%p235) target = $region40
      $region39: #{pointnet_sa_forward.2} parent=31 // pred_region
        %p238 = scmp.lt.s32.totalorder %s19, 1
        %s239 = scalar_select %p238, %s19, 1
        %p240 = scmp.lt.s32.totalorder %s20, 0
        %s241 = scalar_select %p240, %s20, 0
        %s242 = sadd.s32 %s241, %s239
        %s243 = scalar_lea.vmem %s1, %s242
      $region40: #{pointnet_sa_forward.2} parent=31 // pred_fallthru
        _
    $region32: #{pointnet_sa_forward.2} parent=5 // pred_fallthru
      _
    %p244 = scmp.le.s32.totalorder 1, %s12
    %p245 = scmp.lt.s32.totalorder %s12, 3
    %p246 = pnand %p244, %p245
    %p247 = pneg %p246
    // Predicated region
    $region41: #{pointnet_sa_forward.2} parent=5 // pred_check
      _
    $region42: #{pointnet_sa_forward.2} parent=5 // pred_check_branch
      %249 = sbr.rel (%p246) target = $region44
    $region43: #{pointnet_sa_forward.2} parent=5 // pred_region
      %s250 = ssub.s32 %s12, 1
      %p251 = scmp.lt.s32.totalorder %s21, 1
      %s252 = scalar_select %p251, %s21, 1
      %p253 = scmp.lt.s32.totalorder %s22, 0
      %s254 = scalar_select %p253, %s22, 0
      %s255 = smul.addr %s254, 16
      %s256 = smul.addr %s252, 16
      %s257 = sadd.s32 %s255, %s256
      %s258 = smul.addr %s257, 4
      %s259 = scalar_lea.vmem %s0, %s258
      %p260 = pneg %p52
      %p261 = pneg %p49
      %p262 = scmp.lt.s32.totalorder %s21, 1
      %s263 = scalar_select %p262, %s21, 1
      %p264 = scmp.lt.s32.totalorder %s22, 0
      %s265 = scalar_select %p264, %s22, 0
      %s266 = sadd.s32 %s265, %s263
      %s267 = scalar_lea.vmem %s1, %s266
      %p268 = pneg %p80
      %p269 = pneg %p77
      %p270 = pneg %p101
      %p271 = pneg %p98
      %p272 = pneg %p122
      %p273 = pneg %p119
      %p274 = pneg %p143
      %p275 = pneg %p140
      %p276 = pneg %p164
      %p277 = pneg %p161
      %p278 = pneg %p192
      %p279 = pneg %p189
      %p280 = scmp.lt.s32.totalorder %s21, 1
      %s281 = scalar_select %p280, %s21, 1
      %p282 = scmp.lt.s32.totalorder %s22, 0
      %s283 = scalar_select %p282, %s22, 0
      %s284 = smul.addr %s281, 4
      %s285 = sadd.s32 %s283, %s284
      %s286 = smul.addr %s285, 8
      %s287 = scalar_lea.vmem %s6, %s286
      %p288 = scmp.lt.s32.totalorder %s21, 1
      %s289 = scalar_select %p288, %s21, 1
      %p290 = scmp.lt.s32.totalorder %s22, 0
      %s291 = scalar_select %p290, %s22, 0
      %s292 = smul.addr %s291, 16
      %s293 = smul.addr %s289, 16
      %s294 = sadd.s32 %s292, %s293
      %s295 = smul.addr %s294, 4
      %s296 = scalar_lea.vmem %s0, %s295
      %p297 = scmp.lt.s32.totalorder %s21, 1
      %s298 = scalar_select %p297, %s21, 1
      %p299 = scmp.lt.s32.totalorder %s22, 0
      %s300 = scalar_select %p299, %s22, 0
      %s301 = sadd.s32 %s300, %s298
      %s302 = scalar_lea.vmem %s1, %s301
      %p303 = scmp.lt.s32.totalorder %s21, 1
      %s304 = scalar_select %p303, %s21, 1
      %p305 = scmp.lt.s32.totalorder %s22, 0
      %s306 = scalar_select %p305, %s22, 0
      %s307 = smul.addr %s304, 4
      %s308 = sadd.s32 %s306, %s307
      %s309 = smul.addr %s308, 8
      %s310 = scalar_lea.vmem %s6, %s309
      %v312 = vld [vmem:[%s296] sm:$0xff]
      %v313 = vld [vmem:[%s296 + $0x8] sm:$0xff]
      %v314 = vld [vmem:[%s296 + $0x10] sm:$0xff]
      %v315 = vld [vmem:[%s296 + $0x18] sm:$0xff]
      %v316 = vld [vmem:[%s296 + $0x20] sm:$0xff]
      %v317 = vld [vmem:[%s296 + $0x28] sm:$0xff]
      %v318 = vld [vmem:[%s296 + $0x30] sm:$0xff]
      %v319 = vld [vmem:[%s296 + $0x38] sm:$0xff]
      %v320 = vld [vmem:[%s2] sm:$0xf]
      %v321 = vld [vmem:[%s2 + $0x4] sm:$0xf]
      %v322 = vld [vmem:[%s3] sm:$0xff]
      %v323 = vld [vmem:[%s3 + $0x8] sm:$0xff]
      %325 = vset.pattern.permute.xlu0 0
      %326 = vperm.xlu0 %325, %v322
      %v327 = vpop.permute.xlu0 %326
      %330 = vset.pattern.permute.xlu0 0
      %331 = vperm.xlu0 %330, %v323
      %v332 = vpop.permute.xlu0 %331
      %v336 = vunpack.c.l.b16 %v320
      %v337 = vunpack.c.l.b16 %v321
      %v338 = vpack.c.b16 %v337, %v336
      %v347 = vunpack.c.l.b16 %v312
      %v348 = vunpack.c.h.b16 %v312
      %v349 = vunpack.c.l.b16 %v313
      %v350 = vunpack.c.h.b16 %v313
      %v351 = vunpack.c.l.b16 %v314
      %v352 = vunpack.c.h.b16 %v314
      %v353 = vunpack.c.l.b16 %v315
      %v354 = vunpack.c.h.b16 %v315
      %v355 = vunpack.c.l.b16 %v316
      %v356 = vunpack.c.h.b16 %v316
      %v357 = vunpack.c.l.b16 %v317
      %v358 = vunpack.c.h.b16 %v317
      %v359 = vunpack.c.l.b16 %v318
      %v360 = vunpack.c.h.b16 %v318
      %v361 = vunpack.c.l.b16 %v319
      %v362 = vunpack.c.h.b16 %v319
      %v363 = vpack.c.b16 %v355, %v347
      %v364 = vpack.c.b16 %v356, %v348
      %v365 = vpack.c.b16 %v357, %v349
      %v366 = vpack.c.b16 %v358, %v350
      %v367 = vpack.c.b16 %v359, %v351
      %v368 = vpack.c.b16 %v360, %v352
      %v369 = vpack.c.b16 %v361, %v353
      %v370 = vpack.c.b16 %v362, %v354
      %vm379 = vcmask 130048
      %v381 = vsel %vm379, %v338, 0
      %383 = vmatprep.subr.bf16.mxu0 %v364
      %384 = vmatpush1.bf16.msra.mxu0 %v363
      %385 = vmatprep.subr.bf16.mxu0 0
      %386 = vmatpush1.bf16.msra.mxu0 0
      %387 = vmatprep.subr.bf16.mxu0 0
      %388 = vmatpush1.bf16.msra.mxu0 0
      %389 = vmatprep.subr.bf16.mxu0 0
      %390 = vmatpush1.bf16.msra.mxu0 0
      %391 = vmatprep.subr.bf16.mxu0 0
      %392 = vmatpush1.bf16.msra.mxu0 0
      %393 = vmatprep.subr.bf16.mxu0 0
      %394 = vmatpush1.bf16.msra.mxu0 0
      %395 = vmatprep.subr.bf16.mxu0 0
      %396 = vmatpush1.bf16.msra.mxu0 0
      %397 = vmatprep.subr.bf16.mxu0 0
      %398 = vmatpush1.bf16.msra.mxu0 0
      %399 = vmatprep.subr.bf16.mxu0 0
      %400 = vmatpush1.bf16.msra.mxu0 0
      %401 = vmatprep.subr.bf16.mxu0 0
      %402 = vmatpush1.bf16.msra.mxu0 0
      %403 = vmatprep.subr.bf16.mxu0 0
      %404 = vmatpush1.bf16.msra.mxu0 0
      %405 = vmatprep.subr.bf16.mxu0 0
      %406 = vmatpush1.bf16.msra.mxu0 0
      %407 = vmatprep.subr.bf16.mxu0 0
      %408 = vmatpush1.bf16.msra.mxu0 0
      %409 = vmatprep.subr.bf16.mxu0 0
      %410 = vmatpush1.bf16.msra.mxu0 0
      %411 = vmatprep.subr.bf16.mxu0 0
      %412 = vmatpush1.bf16.msra.mxu0 0
      %413 = vmatprep.subr.bf16.mxu0 0
      %414 = vmatpush1.bf16.msra.mxu0 0
      %415 = vmatprep.mubr.bf16.mxu0 0
      %416 = vmatmul.mubr.bf16.gmra.mrb[0].mxu0 %v381
      %v417 = vpop.f32.mrb[0].mxu0
      %v418 = vadd.f32 %v327, %v417
      %v419 = vpop.f32.mrb[0].mxu0
      %v420 = vadd.f32 %v327, %v419
      %v421 = vpop.f32.mrb[0].mxu0
      %v422 = vadd.f32 %v332, %v421
      %v423 = vpop.f32.mrb[0].mxu0
      %v424 = vadd.f32 %v332, %v423
      %425 = vdwg.mxu0
      %426 = vmatprep.subr.bf16.mxu0 %v366
      %427 = vmatpush1.bf16.msra.mxu0 %v365
      %428 = vmatprep.subr.bf16.mxu0 0
      %429 = vmatpush1.bf16.msra.mxu0 0
      %430 = vmatprep.subr.bf16.mxu0 0
      %431 = vmatpush1.bf16.msra.mxu0 0
      %432 = vmatprep.subr.bf16.mxu0 0
      %433 = vmatpush1.bf16.msra.mxu0 0
      %434 = vmatprep.subr.bf16.mxu0 0
      %435 = vmatpush1.bf16.msra.mxu0 0
      %436 = vmatprep.subr.bf16.mxu0 0
      %437 = vmatpush1.bf16.msra.mxu0 0
      %438 = vmatprep.subr.bf16.mxu0 0
      %439 = vmatpush1.bf16.msra.mxu0 0
      %440 = vmatprep.subr.bf16.mxu0 0
      %441 = vmatpush1.bf16.msra.mxu0 0
      %442 = vmatprep.subr.bf16.mxu0 0
      %443 = vmatpush1.bf16.msra.mxu0 0
      %444 = vmatprep.subr.bf16.mxu0 0
      %445 = vmatpush1.bf16.msra.mxu0 0
      %446 = vmatprep.subr.bf16.mxu0 0
      %447 = vmatpush1.bf16.msra.mxu0 0
      %448 = vmatprep.subr.bf16.mxu0 0
      %449 = vmatpush1.bf16.msra.mxu0 0
      %450 = vmatprep.subr.bf16.mxu0 0
      %451 = vmatpush1.bf16.msra.mxu0 0
      %452 = vmatprep.subr.bf16.mxu0 0
      %453 = vmatpush1.bf16.msra.mxu0 0
      %454 = vmatprep.subr.bf16.mxu0 0
      %455 = vmatpush1.bf16.msra.mxu0 0
      %456 = vmatprep.subr.bf16.mxu0 0
      %457 = vmatpush1.bf16.msra.mxu0 0
      %458 = vmatprep.mubr.bf16.mxu0 0
      %459 = vmatmul.mubr.bf16.gmra.mrb[0].mxu0 %v381
      %v460 = vpop.f32.mrb[0].mxu0
      %v461 = vadd.f32 %v327, %v460
      %v462 = vpop.f32.mrb[0].mxu0
      %v463 = vadd.f32 %v327, %v462
      %v464 = vpop.f32.mrb[0].mxu0
      %v465 = vadd.f32 %v332, %v464
      %v466 = vpop.f32.mrb[0].mxu0
      %v467 = vadd.f32 %v332, %v466
      %468 = vdwg.mxu0
      %469 = vmatprep.subr.bf16.mxu0 %v368
      %470 = vmatpush1.bf16.msra.mxu0 %v367
      %471 = vmatprep.subr.bf16.mxu0 0
      %472 = vmatpush1.bf16.msra.mxu0 0
      %473 = vmatprep.subr.bf16.mxu0 0
      %474 = vmatpush1.bf16.msra.mxu0 0
      %475 = vmatprep.subr.bf16.mxu0 0
      %476 = vmatpush1.bf16.msra.mxu0 0
      %477 = vmatprep.subr.bf16.mxu0 0
      %478 = vmatpush1.bf16.msra.mxu0 0
      %479 = vmatprep.subr.bf16.mxu0 0
      %480 = vmatpush1.bf16.msra.mxu0 0
      %481 = vmatprep.subr.bf16.mxu0 0
      %482 = vmatpush1.bf16.msra.mxu0 0
      %483 = vmatprep.subr.bf16.mxu0 0
      %484 = vmatpush1.bf16.msra.mxu0 0
      %485 = vmatprep.subr.bf16.mxu0 0
      %486 = vmatpush1.bf16.msra.mxu0 0
      %487 = vmatprep.subr.bf16.mxu0 0
      %488 = vmatpush1.bf16.msra.mxu0 0
      %489 = vmatprep.subr.bf16.mxu0 0
      %490 = vmatpush1.bf16.msra.mxu0 0
      %491 = vmatprep.subr.bf16.mxu0 0
      %492 = vmatpush1.bf16.msra.mxu0 0
      %493 = vmatprep.subr.bf16.mxu0 0
      %494 = vmatpush1.bf16.msra.mxu0 0
      %495 = vmatprep.subr.bf16.mxu0 0
      %496 = vmatpush1.bf16.msra.mxu0 0
      %497 = vmatprep.subr.bf16.mxu0 0
      %498 = vmatpush1.bf16.msra.mxu0 0
      %499 = vmatprep.subr.bf16.mxu0 0
      %500 = vmatpush1.bf16.msra.mxu0 0
      %501 = vmatprep.mubr.bf16.mxu0 0
      %502 = vmatmul.mubr.bf16.gmra.mrb[0].mxu0 %v381
      %v503 = vpop.f32.mrb[0].mxu0
      %v504 = vadd.f32 %v327, %v503
      %v505 = vpop.f32.mrb[0].mxu0
      %v506 = vadd.f32 %v327, %v505
      %v507 = vpop.f32.mrb[0].mxu0
      %v508 = vadd.f32 %v332, %v507
      %v509 = vpop.f32.mrb[0].mxu0
      %v510 = vadd.f32 %v332, %v509
      %511 = vdwg.mxu0
      %512 = vmatprep.subr.bf16.mxu0 %v370
      %513 = vmatpush1.bf16.msra.mxu0 %v369
      %514 = vmatprep.subr.bf16.mxu0 0
      %515 = vmatpush1.bf16.msra.mxu0 0
      %516 = vmatprep.subr.bf16.mxu0 0
      %517 = vmatpush1.bf16.msra.mxu0 0
      %518 = vmatprep.subr.bf16.mxu0 0
      %519 = vmatpush1.bf16.msra.mxu0 0
      %520 = vmatprep.subr.bf16.mxu0 0
      %521 = vmatpush1.bf16.msra.mxu0 0
      %522 = vmatprep.subr.bf16.mxu0 0
      %523 = vmatpush1.bf16.msra.mxu0 0
      %524 = vmatprep.subr.bf16.mxu0 0
      %525 = vmatpush1.bf16.msra.mxu0 0
      %526 = vmatprep.subr.bf16.mxu0 0
      %527 = vmatpush1.bf16.msra.mxu0 0
      %528 = vmatprep.subr.bf16.mxu0 0
      %529 = vmatpush1.bf16.msra.mxu0 0
      %530 = vmatprep.subr.bf16.mxu0 0
      %531 = vmatpush1.bf16.msra.mxu0 0
      %532 = vmatprep.subr.bf16.mxu0 0
      %533 = vmatpush1.bf16.msra.mxu0 0
      %534 = vmatprep.subr.bf16.mxu0 0
      %535 = vmatpush1.bf16.msra.mxu0 0
      %536 = vmatprep.subr.bf16.mxu0 0
      %537 = vmatpush1.bf16.msra.mxu0 0
      %538 = vmatprep.subr.bf16.mxu0 0
      %539 = vmatpush1.bf16.msra.mxu0 0
      %540 = vmatprep.subr.bf16.mxu0 0
      %541 = vmatpush1.bf16.msra.mxu0 0
      %542 = vmatprep.subr.bf16.mxu0 0
      %543 = vmatpush1.bf16.msra.mxu0 0
      %544 = vmatprep.mubr.bf16.mxu0 0
      %545 = vmatmul.mubr.bf16.gmra.mrb[0].mxu0 %v381
      %v546 = vpop.f32.mrb[0].mxu0
      %v547 = vadd.f32 %v327, %v546
      %v548 = vpop.f32.mrb[0].mxu0
      %v549 = vadd.f32 %v327, %v548
      %v550 = vpop.f32.mrb[0].mxu0
      %v551 = vadd.f32 %v332, %v550
      %v552 = vpop.f32.mrb[0].mxu0
      %v553 = vadd.f32 %v332, %v552
      %554 = vdwg.mxu0
      %v555 = vmax.f32 %v418, 0.0
      %v556 = vmax.f32 %v420, 0.0
      %v557 = vmax.f32 %v461, 0.0
      %v558 = vmax.f32 %v463, 0.0
      %v559 = vmax.f32 %v504, 0.0
      %v560 = vmax.f32 %v506, 0.0
      %v561 = vmax.f32 %v547, 0.0
      %v562 = vmax.f32 %v549, 0.0
      %v563 = vmax.f32 %v422, 0.0
      %v564 = vmax.f32 %v424, 0.0
      %v565 = vmax.f32 %v465, 0.0
      %v566 = vmax.f32 %v467, 0.0
      %v567 = vmax.f32 %v508, 0.0
      %v568 = vmax.f32 %v510, 0.0
      %v569 = vmax.f32 %v551, 0.0
      %v570 = vmax.f32 %v553, 0.0
      %v571 = vpack.c.bf16 %v563, %v555
      %v572 = vpack.c.bf16 %v564, %v556
      %v573 = vpack.c.bf16 %v565, %v557
      %v574 = vpack.c.bf16 %v566, %v558
      %v575 = vpack.c.bf16 %v567, %v559
      %v576 = vpack.c.bf16 %v568, %v560
      %v577 = vpack.c.bf16 %v569, %v561
      %v578 = vpack.c.bf16 %v570, %v562
      %v579 = vld [vmem:[%s4] sm:$0xf]
      %v580 = vld [vmem:[%s4 + $0x4] sm:$0xf]
      %v581 = vld [vmem:[%s4 + $0x8] sm:$0xf]
      %v582 = vld [vmem:[%s4 + $0xc] sm:$0xf]
      %v583 = vld [vmem:[%s5] sm:$0xff]
      %v584 = vld [vmem:[%s5 + $0x8] sm:$0xff]
      %v585 = vld [vmem:[%s5 + $0x10] sm:$0xff]
      %v586 = vld [vmem:[%s5 + $0x18] sm:$0xff]
      %588 = vset.pattern.permute.xlu0 0
      %589 = vperm.xlu0 %588, %v583
      %v590 = vpop.permute.xlu0 %589
      %593 = vset.pattern.permute.xlu0 0
      %594 = vperm.xlu0 %593, %v584
      %v595 = vpop.permute.xlu0 %594
      %598 = vset.pattern.permute.xlu0 0
      %599 = vperm.xlu0 %598, %v585
      %v600 = vpop.permute.xlu0 %599
      %603 = vset.pattern.permute.xlu0 0
      %604 = vperm.xlu0 %603, %v586
      %v605 = vpop.permute.xlu0 %604
      %v611 = vunpack.c.l.b16 %v579
      %v612 = vunpack.c.l.b16 %v580
      %v613 = vunpack.c.l.b16 %v581
      %v614 = vunpack.c.l.b16 %v582
      %v615 = vpack.c.b16 %v612, %v611
      %v616 = vpack.c.b16 %v614, %v613
      %v618 = vsel %vm379, %v615, 0
      %v621 = vsel %vm379, %v616, 0
      %623 = vmatprep.subr.bf16.mxu0 %v572
      %624 = vmatpush1.bf16.msra.mxu0 %v571
      %625 = vmatprep.subr.bf16.mxu0 0
      %626 = vmatpush1.bf16.msra.mxu0 0
      %627 = vmatprep.subr.bf16.mxu0 0
      %628 = vmatpush1.bf16.msra.mxu0 0
      %629 = vmatprep.subr.bf16.mxu0 0
      %630 = vmatpush1.bf16.msra.mxu0 0
      %631 = vmatprep.subr.bf16.mxu0 0
      %632 = vmatpush1.bf16.msra.mxu0 0
      %633 = vmatprep.subr.bf16.mxu0 0
      %634 = vmatpush1.bf16.msra.mxu0 0
      %635 = vmatprep.subr.bf16.mxu0 0
      %636 = vmatpush1.bf16.msra.mxu0 0
      %637 = vmatprep.subr.bf16.mxu0 0
      %638 = vmatpush1.bf16.msra.mxu0 0
      %639 = vmatprep.subr.bf16.mxu0 0
      %640 = vmatpush1.bf16.msra.mxu0 0
      %641 = vmatprep.subr.bf16.mxu0 0
      %642 = vmatpush1.bf16.msra.mxu0 0
      %643 = vmatprep.subr.bf16.mxu0 0
      %644 = vmatpush1.bf16.msra.mxu0 0
      %645 = vmatprep.subr.bf16.mxu0 0
      %646 = vmatpush1.bf16.msra.mxu0 0
      %647 = vmatprep.subr.bf16.mxu0 0
      %648 = vmatpush1.bf16.msra.mxu0 0
      %649 = vmatprep.subr.bf16.mxu0 0
      %650 = vmatpush1.bf16.msra.mxu0 0
      %651 = vmatprep.subr.bf16.mxu0 0
      %652 = vmatpush1.bf16.msra.mxu0 0
      %653 = vmatprep.subr.bf16.mxu0 0
      %654 = vmatpush1.bf16.msra.mxu0 0
      %655 = vmatprep.mubr.bf16.mxu0 0
      %656 = vmatmul.mubr.bf16.gmra.mrb[0].mxu0 %v618
      %v657 = vpop.f32.mrb[0].mxu0
      %v658 = vadd.f32 %v590, %v657
      %v659 = vpop.f32.mrb[0].mxu0
      %v660 = vadd.f32 %v590, %v659
      %v661 = vpop.f32.mrb[0].mxu0
      %v662 = vadd.f32 %v595, %v661
      %v663 = vpop.f32.mrb[0].mxu0
      %v664 = vadd.f32 %v595, %v663
      %665 = vmatprep.mubr.bf16.mxu0 0
      %666 = vmatmul.mubr.bf16.gmra.mrb[0].mxu0 %v621
      %v667 = vpop.f32.mrb[0].mxu0
      %v668 = vadd.f32 %v600, %v667
      %v669 = vpop.f32.mrb[0].mxu0
      %v670 = vadd.f32 %v600, %v669
      %v671 = vpop.f32.mrb[0].mxu0
      %v672 = vadd.f32 %v605, %v671
      %v673 = vpop.f32.mrb[0].mxu0
      %v674 = vadd.f32 %v605, %v673
      %675 = vdwg.mxu0
      %676 = vmatprep.subr.bf16.mxu0 %v574
      %677 = vmatpush1.bf16.msra.mxu0 %v573
      %678 = vmatprep.subr.bf16.mxu0 0
      %679 = vmatpush1.bf16.msra.mxu0 0
      %680 = vmatprep.subr.bf16.mxu0 0
      %681 = vmatpush1.bf16.msra.mxu0 0
      %682 = vmatprep.subr.bf16.mxu0 0
      %683 = vmatpush1.bf16.msra.mxu0 0
      %684 = vmatprep.subr.bf16.mxu0 0
      %685 = vmatpush1.bf16.msra.mxu0 0
      %686 = vmatprep.subr.bf16.mxu0 0
      %687 = vmatpush1.bf16.msra.mxu0 0
      %688 = vmatprep.subr.bf16.mxu0 0
      %689 = vmatpush1.bf16.msra.mxu0 0
      %690 = vmatprep.subr.bf16.mxu0 0
      %691 = vmatpush1.bf16.msra.mxu0 0
      %692 = vmatprep.subr.bf16.mxu0 0
      %693 = vmatpush1.bf16.msra.mxu0 0
      %694 = vmatprep.subr.bf16.mxu0 0
      %695 = vmatpush1.bf16.msra.mxu0 0
      %696 = vmatprep.subr.bf16.mxu0 0
      %697 = vmatpush1.bf16.msra.mxu0 0
      %698 = vmatprep.subr.bf16.mxu0 0
      %699 = vmatpush1.bf16.msra.mxu0 0
      %700 = vmatprep.subr.bf16.mxu0 0
      %701 = vmatpush1.bf16.msra.mxu0 0
      %702 = vmatprep.subr.bf16.mxu0 0
      %703 = vmatpush1.bf16.msra.mxu0 0
      %704 = vmatprep.subr.bf16.mxu0 0
      %705 = vmatpush1.bf16.msra.mxu0 0
      %706 = vmatprep.subr.bf16.mxu0 0
      %707 = vmatpush1.bf16.msra.mxu0 0
      %708 = vmatprep.mubr.bf16.mxu0 0
      %709 = vmatmul.mubr.bf16.gmra.mrb[0].mxu0 %v618
      %v710 = vpop.f32.mrb[0].mxu0
      %v711 = vadd.f32 %v590, %v710
      %v712 = vpop.f32.mrb[0].mxu0
      %v713 = vadd.f32 %v590, %v712
      %v714 = vpop.f32.mrb[0].mxu0
      %v715 = vadd.f32 %v595, %v714
      %v716 = vpop.f32.mrb[0].mxu0
      %v717 = vadd.f32 %v595, %v716
      %718 = vmatprep.mubr.bf16.mxu0 0
      %719 = vmatmul.mubr.bf16.gmra.mrb[0].mxu0 %v621
      %v720 = vpop.f32.mrb[0].mxu0
      %v721 = vadd.f32 %v600, %v720
      %v722 = vpop.f32.mrb[0].mxu0
      %v723 = vadd.f32 %v600, %v722
      %v724 = vpop.f32.mrb[0].mxu0
      %v725 = vadd.f32 %v605, %v724
      %v726 = vpop.f32.mrb[0].mxu0
      %v727 = vadd.f32 %v605, %v726
      %728 = vdwg.mxu0
      %729 = vmatprep.subr.bf16.mxu0 %v576
      %730 = vmatpush1.bf16.msra.mxu0 %v575
      %731 = vmatprep.subr.bf16.mxu0 0
      %732 = vmatpush1.bf16.msra.mxu0 0
      %733 = vmatprep.subr.bf16.mxu0 0
      %734 = vmatpush1.bf16.msra.mxu0 0
      %735 = vmatprep.subr.bf16.mxu0 0
      %736 = vmatpush1.bf16.msra.mxu0 0
      %737 = vmatprep.subr.bf16.mxu0 0
      %738 = vmatpush1.bf16.msra.mxu0 0
      %739 = vmatprep.subr.bf16.mxu0 0
      %740 = vmatpush1.bf16.msra.mxu0 0
      %741 = vmatprep.subr.bf16.mxu0 0
      %742 = vmatpush1.bf16.msra.mxu0 0
      %743 = vmatprep.subr.bf16.mxu0 0
      %744 = vmatpush1.bf16.msra.mxu0 0
      %745 = vmatprep.subr.bf16.mxu0 0
      %746 = vmatpush1.bf16.msra.mxu0 0
      %747 = vmatprep.subr.bf16.mxu0 0
      %748 = vmatpush1.bf16.msra.mxu0 0
      %749 = vmatprep.subr.bf16.mxu0 0
      %750 = vmatpush1.bf16.msra.mxu0 0
      %751 = vmatprep.subr.bf16.mxu0 0
      %752 = vmatpush1.bf16.msra.mxu0 0
      %753 = vmatprep.subr.bf16.mxu0 0
      %754 = vmatpush1.bf16.msra.mxu0 0
      %755 = vmatprep.subr.bf16.mxu0 0
      %756 = vmatpush1.bf16.msra.mxu0 0
      %757 = vmatprep.subr.bf16.mxu0 0
      %758 = vmatpush1.bf16.msra.mxu0 0
      %759 = vmatprep.subr.bf16.mxu0 0
      %760 = vmatpush1.bf16.msra.mxu0 0
      %761 = vmatprep.mubr.bf16.mxu0 0
      %762 = vmatmul.mubr.bf16.gmra.mrb[0].mxu0 %v618
      %v763 = vpop.f32.mrb[0].mxu0
      %v764 = vadd.f32 %v590, %v763
      %v765 = vpop.f32.mrb[0].mxu0
      %v766 = vadd.f32 %v590, %v765
      %v767 = vpop.f32.mrb[0].mxu0
      %v768 = vadd.f32 %v595, %v767
      %v769 = vpop.f32.mrb[0].mxu0
      %v770 = vadd.f32 %v595, %v769
      %771 = vmatprep.mubr.bf16.mxu0 0
      %772 = vmatmul.mubr.bf16.gmra.mrb[0].mxu0 %v621
      %v773 = vpop.f32.mrb[0].mxu0
      %v774 = vadd.f32 %v600, %v773
      %v775 = vpop.f32.mrb[0].mxu0
      %v776 = vadd.f32 %v600, %v775
      %v777 = vpop.f32.mrb[0].mxu0
      %v778 = vadd.f32 %v605, %v777
      %v779 = vpop.f32.mrb[0].mxu0
      %v780 = vadd.f32 %v605, %v779
      %781 = vdwg.mxu0
      %782 = vmatprep.subr.bf16.mxu0 %v578
      %783 = vmatpush1.bf16.msra.mxu0 %v577
      %784 = vmatprep.subr.bf16.mxu0 0
      %785 = vmatpush1.bf16.msra.mxu0 0
      %786 = vmatprep.subr.bf16.mxu0 0
      %787 = vmatpush1.bf16.msra.mxu0 0
      %788 = vmatprep.subr.bf16.mxu0 0
      %789 = vmatpush1.bf16.msra.mxu0 0
      %790 = vmatprep.subr.bf16.mxu0 0
      %791 = vmatpush1.bf16.msra.mxu0 0
      %792 = vmatprep.subr.bf16.mxu0 0
      %793 = vmatpush1.bf16.msra.mxu0 0
      %794 = vmatprep.subr.bf16.mxu0 0
      %795 = vmatpush1.bf16.msra.mxu0 0
      %796 = vmatprep.subr.bf16.mxu0 0
      %797 = vmatpush1.bf16.msra.mxu0 0
      %798 = vmatprep.subr.bf16.mxu0 0
      %799 = vmatpush1.bf16.msra.mxu0 0
      %800 = vmatprep.subr.bf16.mxu0 0
      %801 = vmatpush1.bf16.msra.mxu0 0
      %802 = vmatprep.subr.bf16.mxu0 0
      %803 = vmatpush1.bf16.msra.mxu0 0
      %804 = vmatprep.subr.bf16.mxu0 0
      %805 = vmatpush1.bf16.msra.mxu0 0
      %806 = vmatprep.subr.bf16.mxu0 0
      %807 = vmatpush1.bf16.msra.mxu0 0
      %808 = vmatprep.subr.bf16.mxu0 0
      %809 = vmatpush1.bf16.msra.mxu0 0
      %810 = vmatprep.subr.bf16.mxu0 0
      %811 = vmatpush1.bf16.msra.mxu0 0
      %812 = vmatprep.subr.bf16.mxu0 0
      %813 = vmatpush1.bf16.msra.mxu0 0
      %814 = vmatprep.mubr.bf16.mxu0 0
      %815 = vmatmul.mubr.bf16.gmra.mrb[0].mxu0 %v618
      %v816 = vpop.f32.mrb[0].mxu0
      %v817 = vadd.f32 %v590, %v816
      %v818 = vpop.f32.mrb[0].mxu0
      %v819 = vadd.f32 %v590, %v818
      %v820 = vpop.f32.mrb[0].mxu0
      %v821 = vadd.f32 %v595, %v820
      %v822 = vpop.f32.mrb[0].mxu0
      %v823 = vadd.f32 %v595, %v822
      %824 = vmatprep.mubr.bf16.mxu0 0
      %825 = vmatmul.mubr.bf16.gmra.mrb[0].mxu0 %v621
      %v826 = vpop.f32.mrb[0].mxu0
      %v827 = vadd.f32 %v600, %v826
      %v828 = vpop.f32.mrb[0].mxu0
      %v829 = vadd.f32 %v600, %v828
      %v830 = vpop.f32.mrb[0].mxu0
      %v831 = vadd.f32 %v605, %v830
      %v832 = vpop.f32.mrb[0].mxu0
      %v833 = vadd.f32 %v605, %v832
      %834 = vdwg.mxu0
      %v835 = vmax.f32 %v658, 0.0
      %v836 = vmax.f32 %v660, 0.0
      %v837 = vmax.f32 %v711, 0.0
      %v838 = vmax.f32 %v713, 0.0
      %v839 = vmax.f32 %v764, 0.0
      %v840 = vmax.f32 %v766, 0.0
      %v841 = vmax.f32 %v817, 0.0
      %v842 = vmax.f32 %v819, 0.0
      %v843 = vmax.f32 %v662, 0.0
      %v844 = vmax.f32 %v664, 0.0
      %v845 = vmax.f32 %v715, 0.0
      %v846 = vmax.f32 %v717, 0.0
      %v847 = vmax.f32 %v768, 0.0
      %v848 = vmax.f32 %v770, 0.0
      %v849 = vmax.f32 %v821, 0.0
      %v850 = vmax.f32 %v823, 0.0
      %v851 = vmax.f32 %v668, 0.0
      %v852 = vmax.f32 %v670, 0.0
      %v853 = vmax.f32 %v721, 0.0
      %v854 = vmax.f32 %v723, 0.0
      %v855 = vmax.f32 %v774, 0.0
      %v856 = vmax.f32 %v776, 0.0
      %v857 = vmax.f32 %v827, 0.0
      %v858 = vmax.f32 %v829, 0.0
      %v859 = vmax.f32 %v672, 0.0
      %v860 = vmax.f32 %v674, 0.0
      %v861 = vmax.f32 %v725, 0.0
      %v862 = vmax.f32 %v727, 0.0
      %v863 = vmax.f32 %v778, 0.0
      %v864 = vmax.f32 %v780, 0.0
      %v865 = vmax.f32 %v831, 0.0
      %v866 = vmax.f32 %v833, 0.0
      %v867 = vmax.f32 %v835, %v836
      %v868 = vmax.f32 %v843, %v844
      %v869 = vmax.f32 %v851, %v852
      %v870 = vmax.f32 %v859, %v860
      %v871 = vmax.f32 %v837, %v838
      %v872 = vmax.f32 %v845, %v846
      %v873 = vmax.f32 %v853, %v854
      %v874 = vmax.f32 %v861, %v862
      %v875 = vmax.f32 %v839, %v840
      %v876 = vmax.f32 %v847, %v848
      %v877 = vmax.f32 %v855, %v856
      %v878 = vmax.f32 %v863, %v864
      %v879 = vmax.f32 %v841, %v842
      %v880 = vmax.f32 %v849, %v850
      %v881 = vmax.f32 %v857, %v858
      %v882 = vmax.f32 %v865, %v866
      %v883 = vmax.f32 %v867, %v871
      %v884 = vmax.f32 %v868, %v872
      %v885 = vmax.f32 %v869, %v873
      %v886 = vmax.f32 %v870, %v874
      %v887 = vmax.f32 %v875, %v879
      %v888 = vmax.f32 %v876, %v880
      %v889 = vmax.f32 %v877, %v881
      %v890 = vmax.f32 %v878, %v882
      %v891 = vmax.f32 %v883, %v887
      %v892 = vmax.f32 %v884, %v888
      %v893 = vmax.f32 %v885, %v889
      %v894 = vmax.f32 %v886, %v890
      %v895 = vld [vmem:[%s302] sm:$0x1]
      %v897 = vlaneseq
      %v898 = vshrl.u32 %v897, 7
      %v899 = vsub.s32 0, %v898
      %v900 = vrot.slane %v895, %v899
      %v902 = vmul.f32 %v891, %v900
      %v903 = vmul.f32 %v892, %v900
      %v904 = vmul.f32 %v893, %v900
      %v905 = vmul.f32 %v894, %v900
      %906 = vst [vmem:[%s310] sm:$0xff] %v902
      %907 = vst [vmem:[%s310 + $0x8] sm:$0xff] %v903
      %908 = vst [vmem:[%s310 + $0x10] sm:$0xff] %v904
      %909 = vst [vmem:[%s310 + $0x18] sm:$0xff] %v905
      %p910 = scmp.lt.s32.totalorder %s21, 1
      %s911 = scalar_select %p910, %s21, 1
      %p912 = scmp.lt.s32.totalorder %s22, 0
      %s913 = scalar_select %p912, %s22, 0
      %s914 = smul.addr %s911, 4
      %s915 = sadd.s32 %s913, %s914
      %s916 = smul.addr %s915, 8
      %s917 = scalar_lea.vmem %s6, %s916
      // Predicated region
      $region45: #{pointnet_sa_forward.2} parent=43 // pred_check
        %p918 = pneg %p189
      $region46: #{pointnet_sa_forward.2} parent=43 // pred_check_branch
        %920 = sbr.rel (%p918) target = $region48
      $region47: #{pointnet_sa_forward.2} parent=43 // pred_region
        _
      $region48: #{pointnet_sa_forward.2} parent=43 // pred_fallthru
        _
    $region44: #{pointnet_sa_forward.2} parent=5 // pred_fallthru
      _
    %p921 = scmp.le.s32.totalorder 2, %s12
    // Predicated region
    $region49: #{pointnet_sa_forward.2} parent=5 // pred_check
      %p922 = pneg %p921
    $region50: #{pointnet_sa_forward.2} parent=5 // pred_check_branch
      %924 = sbr.rel (%p922) target = $region52
    $region51: #{pointnet_sa_forward.2} parent=5 // pred_region
      %s925 = ssub.s32 %s12, 2
      // Predicated region
      $region53: #{pointnet_sa_forward.2} parent=51 // pred_check
        %p926 = pneg %p195
      $region54: #{pointnet_sa_forward.2} parent=51 // pred_check_branch
        %928 = sbr.rel (%p926) target = $region56
      $region55: #{pointnet_sa_forward.2} parent=51 // pred_region
        %p929 = scmp.lt.s32.totalorder %s23, 1
        %s930 = scalar_select %p929, %s23, 1
        %p931 = scmp.lt.s32.totalorder %s24, 0
        %s932 = scalar_select %p931, %s24, 0
        %s933 = smul.addr %s930, 4
        %s934 = sadd.s32 %s932, %s933
        %s935 = smul.addr %s934, 8
        %s936 = scalar_lea.vmem %s6, %s935
      $region56: #{pointnet_sa_forward.2} parent=51 // pred_fallthru
        _
    $region52: #{pointnet_sa_forward.2} parent=5 // pred_fallthru
      _
  $region6: #{pointnet_sa_forward.2} parent=0 // loop_footer
    %s16 = sadd.s32 1, %s12
  $region7: #{pointnet_sa_forward.2} parent=0 // loop_footer_branch
    %11 = sbr.rel target = $region3
  $region8: #{pointnet_sa_forward.2} parent=0 // loop_exit
    _

// kernel: pointnet_sa_forward.3
$region0: #{pointnet_sa_forward.3}
  #allocation0 [shape = 'u32[]', space=smem, size = 0x4, offset = 0x4, fixed_abs, tag = 'smem constant byte address 0x4 - core index']
  #allocation1 [shape = 'u32[144,128]{1,0:T(1,128)}', space=vmem, size = 0x12000, scoped, tag = 'internal scratch']
  %s0 = inlined_call_operand.vmem [shape: bf16[2,1,16,2048], index: 0, kind: input, shape index: {}]
  %s1 = inlined_call_operand.vmem [shape: f32[2,1,128], index: 1, kind: input, shape index: {}]
  %s2 = inlined_call_operand.vmem [shape: bf16[16,16], index: 2, kind: input, shape index: {}]
  %s3 = inlined_call_operand.vmem [shape: f32[16,1], index: 3, kind: input, shape index: {}]
  %s4 = inlined_call_operand.vmem [shape: bf16[64,16], index: 4, kind: input, shape index: {}]
  %s5 = inlined_call_operand.vmem [shape: f32[64,1], index: 5, kind: input, shape index: {}]
  %s6 = inlined_call_operand.vmem [shape: f32[2,64,128], index: 6, kind: output, shape index: {}]
  %s7 = sld [smem:[#allocation0]]
  $region57: #{pointnet_sa_forward.3} parent=0
    _
  %s9 = ssub.s32 1, %s7
  %s10 = scalar_select 0, %s9, %s7
  loop: start=0, step=1, limit=4
  $region2: #{pointnet_sa_forward.3} parent=0 // loop_pre_header
    _
  $region3: #{pointnet_sa_forward.3} parent=0 // loop_header
    %s12 = sphi 0, %s16
    %p13 = scmp.ge.s32.totalorder %s12, 4
    %s19 = sphi 0, %s31
    %s20 = sphi 0, %s27
    %s21 = sphi 0, %s19
    %s22 = sphi 0, %s20
    %s23 = sphi 0, %s21
    %s24 = sphi 0, %s22
    %s36 = sphi 0, %s38
    %s39 = sphi 0, %s36
    %s40 = sphi 0, %s39
    %s56 = sphi 0, %s40
    %s64 = sphi 0, %s66
    %s67 = sphi 0, %s64
    %s68 = sphi 0, %s67
    %s84 = sphi 0, %s68
    %s88 = sphi 0, %s88
    %s90 = sphi 0, %s88
    %s91 = sphi 0, %s90
    %s105 = sphi 0, %s91
    %s109 = sphi 0, %s109
    %s111 = sphi 0, %s109
    %s112 = sphi 0, %s111
    %s126 = sphi 0, %s112
    %s130 = sphi 0, %s130
    %s132 = sphi 0, %s130
    %s133 = sphi 0, %s132
    %s147 = sphi 0, %s133
    %s151 = sphi 0, %s151
    %s153 = sphi 0, %s151
    %s154 = sphi 0, %s153
    %s168 = sphi 0, %s154
    %s176 = sphi 0, %s178
    %s179 = sphi 0, %s176
    %s180 = sphi 0, %s179
    %s196 = sphi 0, %s180
  $region4: #{pointnet_sa_forward.3} parent=0 // loop_header_branch
    %15 = sbr.rel (%p13) target = $region8
  $region5: #{pointnet_sa_forward.3} parent=0 // loop_body
    %s17 = ssub.s32 %s12, 1
    %s18 = ssub.s32 %s12, 2
    %s25 = sadd.s32 1, %s20
    %p26 = scmp.ge.s32.totalorder %s25, 1
    %s27 = scalar_select %p26, 0, %s25
    %s28 = sadd.s32 1, %s19
    %s29 = scalar_select %p26, %s28, %s19
    %p30 = scmp.ge.s32.totalorder %s29, 2
    %s31 = scalar_select %p30, 0, %s29
    %s32 = ssub.s32 %s19, %s31
    %s33 = ssub.s32 %s20, %s27
    %s34 = sor.u32 %s32, %s33
    %p35 = scmp.eq.s32.totalorder %s34, 0
    %s37 = sadd.s32 %s36, 1
    %s38 = scalar_select %p35, %s36, %s37
    %p41 = pneg %p35
    %p42 = scmp.eq.s32.totalorder %s12, 1
    %p43 = por %p41, %p42
    %p44 = scmp.ne.s32.totalorder %s36, %s39
    %p45 = scmp.eq.s32.totalorder %s12, 0
    %p46 = por %p44, %p45
    %p47 = scmp.ne.s32.totalorder %s36, %s39
    %p48 = scmp.eq.s32.totalorder %s17, 1
    %p49 = por %p47, %p48
    %p50 = scmp.ne.s32.totalorder %s39, %s40
    %p51 = scmp.eq.s32.totalorder %s17, 0
    %p52 = por %p50, %p51
    %p53 = scmp.ne.s32.totalorder %s39, %s40
    %p54 = scmp.eq.s32.totalorder %s18, 1
    %p55 = por %p53, %p54
    %p57 = scmp.ne.s32.totalorder %s40, %s56
    %p58 = scmp.eq.s32.totalorder %s18, 0
    %p59 = por %p57, %p58
    %s60 = ssub.s32 %s19, %s31
    %s61 = ssub.s32 %s20, %s27
    %s62 = sor.u32 %s60, %s61
    %p63 = scmp.eq.s32.totalorder %s62, 0
    %s65 = sadd.s32 %s64, 1
    %s66 = scalar_select %p63, %s64, %s65
    %p69 = pneg %p63
    %p70 = scmp.eq.s32.totalorder %s12, 1
    %p71 = por %p69, %p70
    %p72 = scmp.ne.s32.totalorder %s64, %s67
    %p73 = scmp.eq.s32.totalorder %s12, 0
    %p74 = por %p72, %p73
    %p75 = scmp.ne.s32.totalorder %s64, %s67
    %p76 = scmp.eq.s32.totalorder %s17, 1
    %p77 = por %p75, %p76
    %p78 = scmp.ne.s32.totalorder %s67, %s68
    %p79 = scmp.eq.s32.totalorder %s17, 0
    %p80 = por %p78, %p79
    %p81 = scmp.ne.s32.totalorder %s67, %s68
    %p82 = scmp.eq.s32.totalorder %s18, 1
    %p83 = por %p81, %p82
    %p85 = scmp.ne.s32.totalorder %s68, %s84
    %p86 = scmp.eq.s32.totalorder %s18, 0
    %p87 = por %p85, %p86
    %s89 = sadd.s32 %s88, 1
    %p92 = scmp.eq.s32.totalorder %s12, 1
    %p93 = scmp.ne.s32.totalorder %s88, %s90
    %p94 = scmp.eq.s32.totalorder %s12, 0
    %p95 = por %p93, %p94
    %p96 = scmp.ne.s32.totalorder %s88, %s90
    %p97 = scmp.eq.s32.totalorder %s17, 1
    %p98 = por %p96, %p97
    %p99 = scmp.ne.s32.totalorder %s90, %s91
    %p100 = scmp.eq.s32.totalorder %s17, 0
    %p101 = por %p99, %p100
    %p102 = scmp.ne.s32.totalorder %s90, %s91
    %p103 = scmp.eq.s32.totalorder %s18, 1
    %p104 = por %p102, %p103
    %p106 = scmp.ne.s32.totalorder %s91, %s105
    %p107 = scmp.eq.s32.totalorder %s18, 0
    %p108 = por %p106, %p107
    %s110 = sadd.s32 %s109, 1
    %p113 = scmp.eq.s32.totalorder %s12, 1
    %p114 = scmp.ne.s32.totalorder %s109, %s111
    %p115 = scmp.eq.s32.totalorder %s12, 0
    %p116 = por %p114, %p115
    %p117 = scmp.ne.s32.totalorder %s109, %s111
    %p118 = scmp.eq.s32.totalorder %s17, 1
    %p119 = por %p117, %p118
    %p120 = scmp.ne.s32.totalorder %s111, %s112
    %p121 = scmp.eq.s32.totalorder %s17, 0
    %p122 = por %p120, %p121
    %p123 = scmp.ne.s32.totalorder %s111, %s112
    %p124 = scmp.eq.s32.totalorder %s18, 1
    %p125 = por %p123, %p124
    %p127 = scmp.ne.s32.totalorder %s112, %s126
    %p128 = scmp.eq.s32.totalorder %s18, 0
    %p129 = por %p127, %p128
    %s131 = sadd.s32 %s130, 1
    %p134 = scmp.eq.s32.totalorder %s12, 1
    %p135 = scmp.ne.s32.totalorder %s130, %s132
    %p136 = scmp.eq.s32.totalorder %s12, 0
    %p137 = por %p135, %p136
    %p138 = scmp.ne.s32.totalorder %s130, %s132
    %p139 = scmp.eq.s32.totalorder %s17, 1
    %p140 = por %p138, %p139
    %p141 = scmp.ne.s32.totalorder %s132, %s133
    %p142 = scmp.eq.s32.totalorder %s17, 0
    %p143 = por %p141, %p142
    %p144 = scmp.ne.s32.totalorder %s132, %s133
    %p145 = scmp.eq.s32.totalorder %s18, 1
    %p146 = por %p144, %p145
    %p148 = scmp.ne.s32.totalorder %s133, %s147
    %p149 = scmp.eq.s32.totalorder %s18, 0
    %p150 = por %p148, %p149
    %s152 = sadd.s32 %s151, 1
    %p155 = scmp.eq.s32.totalorder %s12, 1
    %p156 = scmp.ne.s32.totalorder %s151, %s153
    %p157 = scmp.eq.s32.totalorder %s12, 0
    %p158 = por %p156, %p157
    %p159 = scmp.ne.s32.totalorder %s151, %s153
    %p160 = scmp.eq.s32.totalorder %s17, 1
    %p161 = por %p159, %p160
    %p162 = scmp.ne.s32.totalorder %s153, %s154
    %p163 = scmp.eq.s32.totalorder %s17, 0
    %p164 = por %p162, %p163
    %p165 = scmp.ne.s32.totalorder %s153, %s154
    %p166 = scmp.eq.s32.totalorder %s18, 1
    %p167 = por %p165, %p166
    %p169 = scmp.ne.s32.totalorder %s154, %s168
    %p170 = scmp.eq.s32.totalorder %s18, 0
    %p171 = por %p169, %p170
    %s172 = ssub.s32 %s19, %s31
    %s173 = ssub.s32 %s20, %s27
    %s174 = sor.u32 %s172, %s173
    %p175 = scmp.eq.s32.totalorder %s174, 0
    %s177 = sadd.s32 %s176, 1
    %s178 = scalar_select %p175, %s176, %s177
    %p181 = pneg %p175
    %p182 = scmp.eq.s32.totalorder %s12, 1
    %p183 = por %p181, %p182
    %p184 = scmp.ne.s32.totalorder %s176, %s179
    %p185 = scmp.eq.s32.totalorder %s12, 0
    %p186 = por %p184, %p185
    %p187 = scmp.ne.s32.totalorder %s176, %s179
    %p188 = scmp.eq.s32.totalorder %s17, 1
    %p189 = por %p187, %p188
    %p190 = scmp.ne.s32.totalorder %s179, %s180
    %p191 = scmp.eq.s32.totalorder %s17, 0
    %p192 = por %p190, %p191
    %p193 = scmp.ne.s32.totalorder %s179, %s180
    %p194 = scmp.eq.s32.totalorder %s18, 1
    %p195 = por %p193, %p194
    %p197 = scmp.ne.s32.totalorder %s180, %s196
    %p198 = scmp.eq.s32.totalorder %s18, 0
    %p199 = por %p197, %p198
    %p200 = scmp.le.s32.totalorder 1, %s12
    %p201 = scmp.lt.s32.totalorder %s12, 3
    %p202 = pnand %p200, %p201
    %p203 = pneg %p202
    // Predicated region
    $region9: #{pointnet_sa_forward.3} parent=5 // pred_check
      _
    $region10: #{pointnet_sa_forward.3} parent=5 // pred_check_branch
      %205 = sbr.rel (%p202) target = $region12
    $region11: #{pointnet_sa_forward.3} parent=5 // pred_region
      %s206 = ssub.s32 %s12, 1
      // Predicated region
      $region13: #{pointnet_sa_forward.3} parent=11 // pred_check
        %p207 = pneg %p101
      $region14: #{pointnet_sa_forward.3} parent=11 // pred_check_branch
        %209 = sbr.rel (%p207) target = $region16
      $region15: #{pointnet_sa_forward.3} parent=11 // pred_region
        _
      $region16: #{pointnet_sa_forward.3} parent=11 // pred_fallthru
        _
      // Predicated region
      $region17: #{pointnet_sa_forward.3} parent=11 // pred_check
        %p210 = pneg %p122
      $region18: #{pointnet_sa_forward.3} parent=11 // pred_check_branch
        %212 = sbr.rel (%p210) target = $region20
      $region19: #{pointnet_sa_forward.3} parent=11 // pred_region
        _
      $region20: #{pointnet_sa_forward.3} parent=11 // pred_fallthru
        _
      // Predicated region
      $region21: #{pointnet_sa_forward.3} parent=11 // pred_check
        %p213 = pneg %p143
      $region22: #{pointnet_sa_forward.3} parent=11 // pred_check_branch
        %215 = sbr.rel (%p213) target = $region24
      $region23: #{pointnet_sa_forward.3} parent=11 // pred_region
        _
      $region24: #{pointnet_sa_forward.3} parent=11 // pred_fallthru
        _
      // Predicated region
      $region25: #{pointnet_sa_forward.3} parent=11 // pred_check
        %p216 = pneg %p164
      $region26: #{pointnet_sa_forward.3} parent=11 // pred_check_branch
        %218 = sbr.rel (%p216) target = $region28
      $region27: #{pointnet_sa_forward.3} parent=11 // pred_region
        _
      $region28: #{pointnet_sa_forward.3} parent=11 // pred_fallthru
        _
    $region12: #{pointnet_sa_forward.3} parent=5 // pred_fallthru
      _
    %p219 = scmp.lt.s32.totalorder %s12, 2
    // Predicated region
    $region29: #{pointnet_sa_forward.3} parent=5 // pred_check
      %p220 = pneg %p219
    $region30: #{pointnet_sa_forward.3} parent=5 // pred_check_branch
      %222 = sbr.rel (%p220) target = $region32
    $region31: #{pointnet_sa_forward.3} parent=5 // pred_region
      // Predicated region
      $region33: #{pointnet_sa_forward.3} parent=31 // pred_check
        %p223 = pneg %p46
      $region34: #{pointnet_sa_forward.3} parent=31 // pred_check_branch
        %225 = sbr.rel (%p223) target = $region36
      $region35: #{pointnet_sa_forward.3} parent=31 // pred_region
        %p226 = scmp.lt.s32.totalorder %s19, 1
        %s227 = scalar_select %p226, %s19, 1
        %p228 = scmp.lt.s32.totalorder %s20, 0
        %s229 = scalar_select %p228, %s20, 0
        %s230 = smul.addr %s229, 32
        %s231 = smul.addr %s227, 32
        %s232 = sadd.s32 %s230, %s231
        %s233 = smul.addr %s232, 4
        %s234 = scalar_lea.vmem %s0, %s233
      $region36: #{pointnet_sa_forward.3} parent=31 // pred_fallthru
        _
      // Predicated region
      $region37: #{pointnet_sa_forward.3} parent=31 // pred_check
        %p235 = pneg %p74
      $region38: #{pointnet_sa_forward.3} parent=31 // pred_check_branch
        %237 = sbr.rel (%p235) target = $region40
      $region39: #{pointnet_sa_forward.3} parent=31 // pred_region
        %p238 = scmp.lt.s32.totalorder %s19, 1
        %s239 = scalar_select %p238, %s19, 1
        %p240 = scmp.lt.s32.totalorder %s20, 0
        %s241 = scalar_select %p240, %s20, 0
        %s242 = sadd.s32 %s241, %s239
        %s243 = scalar_lea.vmem %s1, %s242
      $region40: #{pointnet_sa_forward.3} parent=31 // pred_fallthru
        _
    $region32: #{pointnet_sa_forward.3} parent=5 // pred_fallthru
      _
    %p244 = scmp.le.s32.totalorder 1, %s12
    %p245 = scmp.lt.s32.totalorder %s12, 3
    %p246 = pnand %p244, %p245
    %p247 = pneg %p246
    // Predicated region
    $region41: #{pointnet_sa_forward.3} parent=5 // pred_check
      _
    $region42: #{pointnet_sa_forward.3} parent=5 // pred_check_branch
      %249 = sbr.rel (%p246) target = $region44
    $region43: #{pointnet_sa_forward.3} parent=5 // pred_region
      %s250 = ssub.s32 %s12, 1
      %p251 = scmp.lt.s32.totalorder %s21, 1
      %s252 = scalar_select %p251, %s21, 1
      %p253 = scmp.lt.s32.totalorder %s22, 0
      %s254 = scalar_select %p253, %s22, 0
      %s255 = smul.addr %s254, 32
      %s256 = smul.addr %s252, 32
      %s257 = sadd.s32 %s255, %s256
      %s258 = smul.addr %s257, 4
      %s259 = scalar_lea.vmem %s0, %s258
      %p260 = pneg %p52
      %p261 = pneg %p49
      %p262 = scmp.lt.s32.totalorder %s21, 1
      %s263 = scalar_select %p262, %s21, 1
      %p264 = scmp.lt.s32.totalorder %s22, 0
      %s265 = scalar_select %p264, %s22, 0
      %s266 = sadd.s32 %s265, %s263
      %s267 = scalar_lea.vmem %s1, %s266
      %p268 = pneg %p80
      %p269 = pneg %p77
      %p270 = pneg %p101
      %p271 = pneg %p98
      %p272 = pneg %p122
      %p273 = pneg %p119
      %p274 = pneg %p143
      %p275 = pneg %p140
      %p276 = pneg %p164
      %p277 = pneg %p161
      %p278 = pneg %p192
      %p279 = pneg %p189
      %p280 = scmp.lt.s32.totalorder %s21, 1
      %s281 = scalar_select %p280, %s21, 1
      %p282 = scmp.lt.s32.totalorder %s22, 0
      %s283 = scalar_select %p282, %s22, 0
      %s284 = smul.addr %s281, 8
      %s285 = sadd.s32 %s283, %s284
      %s286 = smul.addr %s285, 8
      %s287 = scalar_lea.vmem %s6, %s286
      %p288 = scmp.lt.s32.totalorder %s21, 1
      %s289 = scalar_select %p288, %s21, 1
      %p290 = scmp.lt.s32.totalorder %s22, 0
      %s291 = scalar_select %p290, %s22, 0
      %s292 = smul.addr %s291, 32
      %s293 = smul.addr %s289, 32
      %s294 = sadd.s32 %s292, %s293
      %s295 = smul.addr %s294, 4
      %s296 = scalar_lea.vmem %s0, %s295
      %p297 = scmp.lt.s32.totalorder %s21, 1
      %s298 = scalar_select %p297, %s21, 1
      %p299 = scmp.lt.s32.totalorder %s22, 0
      %s300 = scalar_select %p299, %s22, 0
      %s301 = sadd.s32 %s300, %s298
      %s302 = scalar_lea.vmem %s1, %s301
      %p303 = scmp.lt.s32.totalorder %s21, 1
      %s304 = scalar_select %p303, %s21, 1
      %p305 = scmp.lt.s32.totalorder %s22, 0
      %s306 = scalar_select %p305, %s22, 0
      %s307 = smul.addr %s304, 8
      %s308 = sadd.s32 %s306, %s307
      %s309 = smul.addr %s308, 8
      %s310 = scalar_lea.vmem %s6, %s309
      %v312 = vld [vmem:[%s296] sm:$0xff]
      %v313 = vld [vmem:[%s296 + $0x8] sm:$0xff]
      %v314 = vld [vmem:[%s296 + $0x10] sm:$0xff]
      %v315 = vld [vmem:[%s296 + $0x18] sm:$0xff]
      %v316 = vld [vmem:[%s296 + $0x20] sm:$0xff]
      %v317 = vld [vmem:[%s296 + $0x28] sm:$0xff]
      %v318 = vld [vmem:[%s296 + $0x30] sm:$0xff]
      %v319 = vld [vmem:[%s296 + $0x38] sm:$0xff]
      %v320 = vld [vmem:[%s296 + $0x40] sm:$0xff]
      %v321 = vld [vmem:[%s296 + $0x48] sm:$0xff]
      %v322 = vld [vmem:[%s296 + $0x50] sm:$0xff]
      %v323 = vld [vmem:[%s296 + $0x58] sm:$0xff]
      %v324 = vld [vmem:[%s296 + $0x60] sm:$0xff]
      %v325 = vld [vmem:[%s296 + $0x68] sm:$0xff]
      %v326 = vld [vmem:[%s296 + $0x70] sm:$0xff]
      %v327 = vld [vmem:[%s296 + $0x78] sm:$0xff]
      %v328 = vld [vmem:[%s2] sm:$0xf]
      %v329 = vld [vmem:[%s2 + $0x4] sm:$0xf]
      %v330 = vld [vmem:[%s3] sm:$0xff]
      %v331 = vld [vmem:[%s3 + $0x8] sm:$0xff]
      %333 = vset.pattern.permute.xlu0 0
      %334 = vperm.xlu0 %333, %v330
      %v335 = vpop.permute.xlu0 %334
      %338 = vset.pattern.permute.xlu0 0
      %339 = vperm.xlu0 %338, %v331
      %v340 = vpop.permute.xlu0 %339
      %v344 = vunpack.c.l.b16 %v328
      %v345 = vunpack.c.l.b16 %v329
      %v346 = vpack.c.b16 %v345, %v344
      %v363 = vunpack.c.l.b16 %v312
      %v364 = vunpack.c.h.b16 %v312
      %v365 = vunpack.c.l.b16 %v313
      %v366 = vunpack.c.h.b16 %v313
      %v367 = vunpack.c.l.b16 %v314
      %v368 = vunpack.c.h.b16 %v314
      %v369 = vunpack.c.l.b16 %v315
      %v370 = vunpack.c.h.b16 %v315
      %v371 = vunpack.c.l.b16 %v316
      %v372 = vunpack.c.h.b16 %v316
      %v373 = vunpack.c.l.b16 %v317
      %v374 = vunpack.c.h.b16 %v317
      %v375 = vunpack.c.l.b16 %v318
      %v376 = vunpack.c.h.b16 %v318
      %v377 = vunpack.c.l.b16 %v319
      %v378 = vunpack.c.h.b16 %v319
      %v379 = vunpack.c.l.b16 %v320
      %v380 = vunpack.c.h.b16 %v320
      %v381 = vunpack.c.l.b16 %v321
      %v382 = vunpack.c.h.b16 %v321
      %v383 = vunpack.c.l.b16 %v322
      %v384 = vunpack.c.h.b16 %v322
      %v385 = vunpack.c.l.b16 %v323
      %v386 = vunpack.c.h.b16 %v323
      %v387 = vunpack.c.l.b16 %v324
      %v388 = vunpack.c.h.b16 %v324
      %v389 = vunpack.c.l.b16 %v325
      %v390 = vunpack.c.h.b16 %v325
      %v391 = vunpack.c.l.b16 %v326
      %v392 = vunpack.c.h.b16 %v326
      %v393 = vunpack.c.l.b16 %v327
      %v394 = vunpack.c.h.b16 %v327
      %v395 = vpack.c.b16 %v379, %v363
      %v396 = vpack.c.b16 %v380, %v364
      %v397 = vpack.c.b16 %v381, %v365
      %v398 = vpack.c.b16 %v382, %v366
      %v399 = vpack.c.b16 %v383, %v367
      %v400 = vpack.c.b16 %v384, %v368
      %v401 = vpack.c.b16 %v385, %v369
      %v402 = vpack.c.b16 %v386, %v370
      %v403 = vpack.c.b16 %v387, %v371
      %v404 = vpack.c.b16 %v388, %v372
      %v405 = vpack.c.b16 %v389, %v373
      %v406 = vpack.c.b16 %v390, %v374
      %v407 = vpack.c.b16 %v391, %v375
      %v408 = vpack.c.b16 %v392, %v376
      %v409 = vpack.c.b16 %v393, %v377
      %v410 = vpack.c.b16 %v394, %v378
      %vm427 = vcmask 130048
      %v429 = vsel %vm427, %v346, 0
      %431 = vmatprep.subr.bf16.mxu0 %v396
      %432 = vmatpush1.bf16.msra.mxu0 %v395
      %433 = vmatprep.subr.bf16.mxu0 0
      %434 = vmatpush1.bf16.msra.mxu0 0
      %435 = vmatprep.subr.bf16.mxu0 0
      %436 = vmatpush1.bf16.msra.mxu0 0
      %437 = vmatprep.subr.bf16.mxu0 0
      %438 = vmatpush1.bf16.msra.mxu0 0
      %439 = vmatprep.subr.bf16.mxu0 0
      %440 = vmatpush1.bf16.msra.mxu0 0
      %441 = vmatprep.subr.bf16.mxu0 0
      %442 = vmatpush1.bf16.msra.mxu0 0
      %443 = vmatprep.subr.bf16.mxu0 0
      %444 = vmatpush1.bf16.msra.mxu0 0
      %445 = vmatprep.subr.bf16.mxu0 0
      %446 = vmatpush1.bf16.msra.mxu0 0
      %447 = vmatprep.subr.bf16.mxu0 0
      %448 = vmatpush1.bf16.msra.mxu0 0
      %449 = vmatprep.subr.bf16.mxu0 0
      %450 = vmatpush1.bf16.msra.mxu0 0
      %451 = vmatprep.subr.bf16.mxu0 0
      %452 = vmatpush1.bf16.msra.mxu0 0
      %453 = vmatprep.subr.bf16.mxu0 0
      %454 = vmatpush1.bf16.msra.mxu0 0
      %455 = vmatprep.subr.bf16.mxu0 0
      %456 = vmatpush1.bf16.msra.mxu0 0
      %457 = vmatprep.subr.bf16.mxu0 0
      %458 = vmatpush1.bf16.msra.mxu0 0
      %459 = vmatprep.subr.bf16.mxu0 0
      %460 = vmatpush1.bf16.msra.mxu0 0
      %461 = vmatprep.subr.bf16.mxu0 0
      %462 = vmatpush1.bf16.msra.mxu0 0
      %463 = vmatprep.mubr.bf16.mxu0 0
      %464 = vmatmul.mubr.bf16.gmra.mrb[0].mxu0 %v429
      %v465 = vpop.f32.mrb[0].mxu0
      %v466 = vadd.f32 %v335, %v465
      %v467 = vpop.f32.mrb[0].mxu0
      %v468 = vadd.f32 %v335, %v467
      %v469 = vpop.f32.mrb[0].mxu0
      %v470 = vadd.f32 %v340, %v469
      %v471 = vpop.f32.mrb[0].mxu0
      %v472 = vadd.f32 %v340, %v471
      %473 = vdwg.mxu0
      %474 = vmatprep.subr.bf16.mxu0 %v398
      %475 = vmatpush1.bf16.msra.mxu0 %v397
      %476 = vmatprep.subr.bf16.mxu0 0
      %477 = vmatpush1.bf16.msra.mxu0 0
      %478 = vmatprep.subr.bf16.mxu0 0
      %479 = vmatpush1.bf16.msra.mxu0 0
      %480 = vmatprep.subr.bf16.mxu0 0
      %481 = vmatpush1.bf16.msra.mxu0 0
      %482 = vmatprep.subr.bf16.mxu0 0
      %483 = vmatpush1.bf16.msra.mxu0 0
      %484 = vmatprep.subr.bf16.mxu0 0
      %485 = vmatpush1.bf16.msra.mxu0 0
      %486 = vmatprep.subr.bf16.mxu0 0
      %487 = vmatpush1.bf16.msra.mxu0 0
      %488 = vmatprep.subr.bf16.mxu0 0
      %489 = vmatpush1.bf16.msra.mxu0 0
      %490 = vmatprep.subr.bf16.mxu0 0
      %491 = vmatpush1.bf16.msra.mxu0 0
      %492 = vmatprep.subr.bf16.mxu0 0
      %493 = vmatpush1.bf16.msra.mxu0 0
      %494 = vmatprep.subr.bf16.mxu0 0
      %495 = vmatpush1.bf16.msra.mxu0 0
      %496 = vmatprep.subr.bf16.mxu0 0
      %497 = vmatpush1.bf16.msra.mxu0 0
      %498 = vmatprep.subr.bf16.mxu0 0
      %499 = vmatpush1.bf16.msra.mxu0 0
      %500 = vmatprep.subr.bf16.mxu0 0
      %501 = vmatpush1.bf16.msra.mxu0 0
      %502 = vmatprep.subr.bf16.mxu0 0
      %503 = vmatpush1.bf16.msra.mxu0 0
      %504 = vmatprep.subr.bf16.mxu0 0
      %505 = vmatpush1.bf16.msra.mxu0 0
      %506 = vmatprep.mubr.bf16.mxu0 0
      %507 = vmatmul.mubr.bf16.gmra.mrb[0].mxu0 %v429
      %v508 = vpop.f32.mrb[0].mxu0
      %v509 = vadd.f32 %v335, %v508
      %v510 = vpop.f32.mrb[0].mxu0
      %v511 = vadd.f32 %v335, %v510
      %v512 = vpop.f32.mrb[0].mxu0
      %v513 = vadd.f32 %v340, %v512
      %v514 = vpop.f32.mrb[0].mxu0
      %v515 = vadd.f32 %v340, %v514
      %516 = vdwg.mxu0
      %517 = vmatprep.subr.bf16.mxu0 %v400
      %518 = vmatpush1.bf16.msra.mxu0 %v399
      %519 = vmatprep.subr.bf16.mxu0 0
      %520 = vmatpush1.bf16.msra.mxu0 0
      %521 = vmatprep.subr.bf16.mxu0 0
      %522 = vmatpush1.bf16.msra.mxu0 0
      %523 = vmatprep.subr.bf16.mxu0 0
      %524 = vmatpush1.bf16.msra.mxu0 0
      %525 = vmatprep.subr.bf16.mxu0 0
      %526 = vmatpush1.bf16.msra.mxu0 0
      %527 = vmatprep.subr.bf16.mxu0 0
      %528 = vmatpush1.bf16.msra.mxu0 0
      %529 = vmatprep.subr.bf16.mxu0 0
      %530 = vmatpush1.bf16.msra.mxu0 0
      %531 = vmatprep.subr.bf16.mxu0 0
      %532 = vmatpush1.bf16.msra.mxu0 0
      %533 = vmatprep.subr.bf16.mxu0 0
      %534 = vmatpush1.bf16.msra.mxu0 0
      %535 = vmatprep.subr.bf16.mxu0 0
      %536 = vmatpush1.bf16.msra.mxu0 0
      %537 = vmatprep.subr.bf16.mxu0 0
      %538 = vmatpush1.bf16.msra.mxu0 0
      %539 = vmatprep.subr.bf16.mxu0 0
      %540 = vmatpush1.bf16.msra.mxu0 0
      %541 = vmatprep.subr.bf16.mxu0 0
      %542 = vmatpush1.bf16.msra.mxu0 0
      %543 = vmatprep.subr.bf16.mxu0 0
      %544 = vmatpush1.bf16.msra.mxu0 0
      %545 = vmatprep.subr.bf16.mxu0 0
      %546 = vmatpush1.bf16.msra.mxu0 0
      %547 = vmatprep.subr.bf16.mxu0 0
      %548 = vmatpush1.bf16.msra.mxu0 0
      %549 = vmatprep.mubr.bf16.mxu0 0
      %550 = vmatmul.mubr.bf16.gmra.mrb[0].mxu0 %v429
      %v551 = vpop.f32.mrb[0].mxu0
      %v552 = vadd.f32 %v335, %v551
      %v553 = vpop.f32.mrb[0].mxu0
      %v554 = vadd.f32 %v335, %v553
      %v555 = vpop.f32.mrb[0].mxu0
      %v556 = vadd.f32 %v340, %v555
      %v557 = vpop.f32.mrb[0].mxu0
      %v558 = vadd.f32 %v340, %v557
      %559 = vdwg.mxu0
      %560 = vmatprep.subr.bf16.mxu0 %v402
      %561 = vmatpush1.bf16.msra.mxu0 %v401
      %562 = vmatprep.subr.bf16.mxu0 0
      %563 = vmatpush1.bf16.msra.mxu0 0
      %564 = vmatprep.subr.bf16.mxu0 0
      %565 = vmatpush1.bf16.msra.mxu0 0
      %566 = vmatprep.subr.bf16.mxu0 0
      %567 = vmatpush1.bf16.msra.mxu0 0
      %568 = vmatprep.subr.bf16.mxu0 0
      %569 = vmatpush1.bf16.msra.mxu0 0
      %570 = vmatprep.subr.bf16.mxu0 0
      %571 = vmatpush1.bf16.msra.mxu0 0
      %572 = vmatprep.subr.bf16.mxu0 0
      %573 = vmatpush1.bf16.msra.mxu0 0
      %574 = vmatprep.subr.bf16.mxu0 0
      %575 = vmatpush1.bf16.msra.mxu0 0
      %576 = vmatprep.subr.bf16.mxu0 0
      %577 = vmatpush1.bf16.msra.mxu0 0
      %578 = vmatprep.subr.bf16.mxu0 0
      %579 = vmatpush1.bf16.msra.mxu0 0
      %580 = vmatprep.subr.bf16.mxu0 0
      %581 = vmatpush1.bf16.msra.mxu0 0
      %582 = vmatprep.subr.bf16.mxu0 0
      %583 = vmatpush1.bf16.msra.mxu0 0
      %584 = vmatprep.subr.bf16.mxu0 0
      %585 = vmatpush1.bf16.msra.mxu0 0
      %586 = vmatprep.subr.bf16.mxu0 0
      %587 = vmatpush1.bf16.msra.mxu0 0
      %588 = vmatprep.subr.bf16.mxu0 0
      %589 = vmatpush1.bf16.msra.mxu0 0
      %590 = vmatprep.subr.bf16.mxu0 0
      %591 = vmatpush1.bf16.msra.mxu0 0
      %592 = vmatprep.mubr.bf16.mxu0 0
      %593 = vmatmul.mubr.bf16.gmra.mrb[0].mxu0 %v429
      %v594 = vpop.f32.mrb[0].mxu0
      %v595 = vadd.f32 %v335, %v594
      %v596 = vpop.f32.mrb[0].mxu0
      %v597 = vadd.f32 %v335, %v596
      %v598 = vpop.f32.mrb[0].mxu0
      %v599 = vadd.f32 %v340, %v598
      %v600 = vpop.f32.mrb[0].mxu0
      %v601 = vadd.f32 %v340, %v600
      %602 = vdwg.mxu0
      %603 = vmatprep.subr.bf16.mxu0 %v404
      %604 = vmatpush1.bf16.msra.mxu0 %v403
      %605 = vmatprep.subr.bf16.mxu0 0
      %606 = vmatpush1.bf16.msra.mxu0 0
      %607 = vmatprep.subr.bf16.mxu0 0
      %608 = vmatpush1.bf16.msra.mxu0 0
      %609 = vmatprep.subr.bf16.mxu0 0
      %610 = vmatpush1.bf16.msra.mxu0 0
      %611 = vmatprep.subr.bf16.mxu0 0
      %612 = vmatpush1.bf16.msra.mxu0 0
      %613 = vmatprep.subr.bf16.mxu0 0
      %614 = vmatpush1.bf16.msra.mxu0 0
      %615 = vmatprep.subr.bf16.mxu0 0
      %616 = vmatpush1.bf16.msra.mxu0 0
      %617 = vmatprep.subr.bf16.mxu0 0
      %618 = vmatpush1.bf16.msra.mxu0 0
      %619 = vmatprep.subr.bf16.mxu0 0
      %620 = vmatpush1.bf16.msra.mxu0 0
      %621 = vmatprep.subr.bf16.mxu0 0
      %622 = vmatpush1.bf16.msra.mxu0 0
      %623 = vmatprep.subr.bf16.mxu0 0
      %624 = vmatpush1.bf16.msra.mxu0 0
      %625 = vmatprep.subr.bf16.mxu0 0
      %626 = vmatpush1.bf16.msra.mxu0 0
      %627 = vmatprep.subr.bf16.mxu0 0
      %628 = vmatpush1.bf16.msra.mxu0 0
      %629 = vmatprep.subr.bf16.mxu0 0
      %630 = vmatpush1.bf16.msra.mxu0 0
      %631 = vmatprep.subr.bf16.mxu0 0
      %632 = vmatpush1.bf16.msra.mxu0 0
      %633 = vmatprep.subr.bf16.mxu0 0
      %634 = vmatpush1.bf16.msra.mxu0 0
      %635 = vmatprep.mubr.bf16.mxu0 0
      %636 = vmatmul.mubr.bf16.gmra.mrb[0].mxu0 %v429
      %v637 = vpop.f32.mrb[0].mxu0
      %v638 = vadd.f32 %v335, %v637
      %v639 = vpop.f32.mrb[0].mxu0
      %v640 = vadd.f32 %v335, %v639
      %v641 = vpop.f32.mrb[0].mxu0
      %v642 = vadd.f32 %v340, %v641
      %v643 = vpop.f32.mrb[0].mxu0
      %v644 = vadd.f32 %v340, %v643
      %645 = vdwg.mxu0
      %646 = vmatprep.subr.bf16.mxu0 %v406
      %647 = vmatpush1.bf16.msra.mxu0 %v405
      %648 = vmatprep.subr.bf16.mxu0 0
      %649 = vmatpush1.bf16.msra.mxu0 0
      %650 = vmatprep.subr.bf16.mxu0 0
      %651 = vmatpush1.bf16.msra.mxu0 0
      %652 = vmatprep.subr.bf16.mxu0 0
      %653 = vmatpush1.bf16.msra.mxu0 0
      %654 = vmatprep.subr.bf16.mxu0 0
      %655 = vmatpush1.bf16.msra.mxu0 0
      %656 = vmatprep.subr.bf16.mxu0 0
      %657 = vmatpush1.bf16.msra.mxu0 0
      %658 = vmatprep.subr.bf16.mxu0 0
      %659 = vmatpush1.bf16.msra.mxu0 0
      %660 = vmatprep.subr.bf16.mxu0 0
      %661 = vmatpush1.bf16.msra.mxu0 0
      %662 = vmatprep.subr.bf16.mxu0 0
      %663 = vmatpush1.bf16.msra.mxu0 0
      %664 = vmatprep.subr.bf16.mxu0 0
      %665 = vmatpush1.bf16.msra.mxu0 0
      %666 = vmatprep.subr.bf16.mxu0 0
      %667 = vmatpush1.bf16.msra.mxu0 0
      %668 = vmatprep.subr.bf16.mxu0 0
      %669 = vmatpush1.bf16.msra.mxu0 0
      %670 = vmatprep.subr.bf16.mxu0 0
      %671 = vmatpush1.bf16.msra.mxu0 0
      %672 = vmatprep.subr.bf16.mxu0 0
      %673 = vmatpush1.bf16.msra.mxu0 0
      %674 = vmatprep.subr.bf16.mxu0 0
      %675 = vmatpush1.bf16.msra.mxu0 0
      %676 = vmatprep.subr.bf16.mxu0 0
      %677 = vmatpush1.bf16.msra.mxu0 0
      %678 = vmatprep.mubr.bf16.mxu0 0
      %679 = vmatmul.mubr.bf16.gmra.mrb[0].mxu0 %v429
      %v680 = vpop.f32.mrb[0].mxu0
      %v681 = vadd.f32 %v335, %v680
      %v682 = vpop.f32.mrb[0].mxu0
      %v683 = vadd.f32 %v335, %v682
      %v684 = vpop.f32.mrb[0].mxu0
      %v685 = vadd.f32 %v340, %v684
      %v686 = vpop.f32.mrb[0].mxu0
      %v687 = vadd.f32 %v340, %v686
      %688 = vdwg.mxu0
      %689 = vmatprep.subr.bf16.mxu0 %v408
      %690 = vmatpush1.bf16.msra.mxu0 %v407
      %691 = vmatprep.subr.bf16.mxu0 0
      %692 = vmatpush1.bf16.msra.mxu0 0
      %693 = vmatprep.subr.bf16.mxu0 0
      %694 = vmatpush1.bf16.msra.mxu0 0
      %695 = vmatprep.subr.bf16.mxu0 0
      %696 = vmatpush1.bf16.msra.mxu0 0
      %697 = vmatprep.subr.bf16.mxu0 0
      %698 = vmatpush1.bf16.msra.mxu0 0
      %699 = vmatprep.subr.bf16.mxu0 0
      %700 = vmatpush1.bf16.msra.mxu0 0
      %701 = vmatprep.subr.bf16.mxu0 0
      %702 = vmatpush1.bf16.msra.mxu0 0
      %703 = vmatprep.subr.bf16.mxu0 0
      %704 = vmatpush1.bf16.msra.mxu0 0
      %705 = vmatprep.subr.bf16.mxu0 0
      %706 = vmatpush1.bf16.msra.mxu0 0
      %707 = vmatprep.subr.bf16.mxu0 0
      %708 = vmatpush1.bf16.msra.mxu0 0
      %709 = vmatprep.subr.bf16.mxu0 0
      %710 = vmatpush1.bf16.msra.mxu0 0
      %711 = vmatprep.subr.bf16.mxu0 0
      %712 = vmatpush1.bf16.msra.mxu0 0
      %713 = vmatprep.subr.bf16.mxu0 0
      %714 = vmatpush1.bf16.msra.mxu0 0
      %715 = vmatprep.subr.bf16.mxu0 0
      %716 = vmatpush1.bf16.msra.mxu0 0
      %717 = vmatprep.subr.bf16.mxu0 0
      %718 = vmatpush1.bf16.msra.mxu0 0
      %719 = vmatprep.subr.bf16.mxu0 0
      %720 = vmatpush1.bf16.msra.mxu0 0
      %721 = vmatprep.mubr.bf16.mxu0 0
      %722 = vmatmul.mubr.bf16.gmra.mrb[0].mxu0 %v429
      %v723 = vpop.f32.mrb[0].mxu0
      %v724 = vadd.f32 %v335, %v723
      %v725 = vpop.f32.mrb[0].mxu0
      %v726 = vadd.f32 %v335, %v725
      %v727 = vpop.f32.mrb[0].mxu0
      %v728 = vadd.f32 %v340, %v727
      %v729 = vpop.f32.mrb[0].mxu0
      %v730 = vadd.f32 %v340, %v729
      %731 = vdwg.mxu0
      %732 = vmatprep.subr.bf16.mxu0 %v410
      %733 = vmatpush1.bf16.msra.mxu0 %v409
      %734 = vmatprep.subr.bf16.mxu0 0
      %735 = vmatpush1.bf16.msra.mxu0 0
      %736 = vmatprep.subr.bf16.mxu0 0
      %737 = vmatpush1.bf16.msra.mxu0 0
      %738 = vmatprep.subr.bf16.mxu0 0
      %739 = vmatpush1.bf16.msra.mxu0 0
      %740 = vmatprep.subr.bf16.mxu0 0
      %741 = vmatpush1.bf16.msra.mxu0 0
      %742 = vmatprep.subr.bf16.mxu0 0
      %743 = vmatpush1.bf16.msra.mxu0 0
      %744 = vmatprep.subr.bf16.mxu0 0
      %745 = vmatpush1.bf16.msra.mxu0 0
      %746 = vmatprep.subr.bf16.mxu0 0
      %747 = vmatpush1.bf16.msra.mxu0 0
      %748 = vmatprep.subr.bf16.mxu0 0
      %749 = vmatpush1.bf16.msra.mxu0 0
      %750 = vmatprep.subr.bf16.mxu0 0
      %751 = vmatpush1.bf16.msra.mxu0 0
      %752 = vmatprep.subr.bf16.mxu0 0
      %753 = vmatpush1.bf16.msra.mxu0 0
      %754 = vmatprep.subr.bf16.mxu0 0
      %755 = vmatpush1.bf16.msra.mxu0 0
      %756 = vmatprep.subr.bf16.mxu0 0
      %757 = vmatpush1.bf16.msra.mxu0 0
      %758 = vmatprep.subr.bf16.mxu0 0
      %759 = vmatpush1.bf16.msra.mxu0 0
      %760 = vmatprep.subr.bf16.mxu0 0
      %761 = vmatpush1.bf16.msra.mxu0 0
      %762 = vmatprep.subr.bf16.mxu0 0
      %763 = vmatpush1.bf16.msra.mxu0 0
      %764 = vmatprep.mubr.bf16.mxu0 0
      %765 = vmatmul.mubr.bf16.gmra.mrb[0].mxu0 %v429
      %v766 = vpop.f32.mrb[0].mxu0
      %v767 = vadd.f32 %v335, %v766
      %v768 = vpop.f32.mrb[0].mxu0
      %v769 = vadd.f32 %v335, %v768
      %v770 = vpop.f32.mrb[0].mxu0
      %v771 = vadd.f32 %v340, %v770
      %v772 = vpop.f32.mrb[0].mxu0
      %v773 = vadd.f32 %v340, %v772
      %774 = vdwg.mxu0
      %v775 = vmax.f32 %v466, 0.0
      %v776 = vmax.f32 %v468, 0.0
      %v777 = vmax.f32 %v509, 0.0
      %v778 = vmax.f32 %v511, 0.0
      %v779 = vmax.f32 %v552, 0.0
      %v780 = vmax.f32 %v554, 0.0
      %v781 = vmax.f32 %v595, 0.0
      %v782 = vmax.f32 %v597, 0.0
      %v783 = vmax.f32 %v638, 0.0
      %v784 = vmax.f32 %v640, 0.0
      %v785 = vmax.f32 %v681, 0.0
      %v786 = vmax.f32 %v683, 0.0
      %v787 = vmax.f32 %v724, 0.0
      %v788 = vmax.f32 %v726, 0.0
      %v789 = vmax.f32 %v767, 0.0
      %v790 = vmax.f32 %v769, 0.0
      %v791 = vmax.f32 %v470, 0.0
      %v792 = vmax.f32 %v472, 0.0
      %v793 = vmax.f32 %v513, 0.0
      %v794 = vmax.f32 %v515, 0.0
      %v795 = vmax.f32 %v556, 0.0
      %v796 = vmax.f32 %v558, 0.0
      %v797 = vmax.f32 %v599, 0.0
      %v798 = vmax.f32 %v601, 0.0
      %v799 = vmax.f32 %v642, 0.0
      %v800 = vmax.f32 %v644, 0.0
      %v801 = vmax.f32 %v685, 0.0
      %v802 = vmax.f32 %v687, 0.0
      %v803 = vmax.f32 %v728, 0.0
      %v804 = vmax.f32 %v730, 0.0
      %v805 = vmax.f32 %v771, 0.0
      %v806 = vmax.f32 %v773, 0.0
      %v807 = vpack.c.bf16 %v791, %v775
      %v808 = vpack.c.bf16 %v792, %v776
      %v809 = vpack.c.bf16 %v793, %v777
      %v810 = vpack.c.bf16 %v794, %v778
      %v811 = vpack.c.bf16 %v795, %v779
      %v812 = vpack.c.bf16 %v796, %v780
      %v813 = vpack.c.bf16 %v797, %v781
      %v814 = vpack.c.bf16 %v798, %v782
      %v815 = vpack.c.bf16 %v799, %v783
      %v816 = vpack.c.bf16 %v800, %v784
      %v817 = vpack.c.bf16 %v801, %v785
      %v818 = vpack.c.bf16 %v802, %v786
      %v819 = vpack.c.bf16 %v803, %v787
      %v820 = vpack.c.bf16 %v804, %v788
      %v821 = vpack.c.bf16 %v805, %v789
      %v822 = vpack.c.bf16 %v806, %v790
      %v823 = vld [vmem:[%s4] sm:$0xf]
      %v824 = vld [vmem:[%s4 + $0x4] sm:$0xf]
      %v825 = vld [vmem:[%s4 + $0x8] sm:$0xf]
      %v826 = vld [vmem:[%s4 + $0xc] sm:$0xf]
      %v827 = vld [vmem:[%s4 + $0x10] sm:$0xf]
      %v828 = vld [vmem:[%s4 + $0x14] sm:$0xf]
      %v829 = vld [vmem:[%s4 + $0x18] sm:$0xf]
      %v830 = vld [vmem:[%s4 + $0x1c] sm:$0xf]
      %v831 = vld [vmem:[%s5] sm:$0xff]
      %v832 = vld [vmem:[%s5 + $0x8] sm:$0xff]
      %v833 = vld [vmem:[%s5 + $0x10] sm:$0xff]
      %v834 = vld [vmem:[%s5 + $0x18] sm:$0xff]
      %v835 = vld [vmem:[%s5 + $0x20] sm:$0xff]
      %v836 = vld [vmem:[%s5 + $0x28] sm:$0xff]
      %v837 = vld [vmem:[%s5 + $0x30] sm:$0xff]
      %v838 = vld [vmem:[%s5 + $0x38] sm:$0xff]
      %840 = vset.pattern.permute.xlu0 0
      %841 = vperm.xlu0 %840, %v831
      %v842 = vpop.permute.xlu0 %841
      %845 = vset.pattern.permute.xlu0 0
      %846 = vperm.xlu0 %845, %v832
      %v847 = vpop.permute.xlu0 %846
      %850 = vset.pattern.permute.xlu0 0
      %851 = vperm.xlu0 %850, %v833
      %v852 = vpop.permute.xlu0 %851
      %855 = vset.pattern.permute.xlu0 0
      %856 = vperm.xlu0 %855, %v834
      %v857 = vpop.permute.xlu0 %856
      %860 = vset.pattern.permute.xlu0 0
      %861 = vperm.xlu0 %860, %v835
      %v862 = vpop.permute.xlu0 %861
      %865 = vset.pattern.permute.xlu0 0
      %866 = vperm.xlu0 %865, %v836
      %v867 = vpop.permute.xlu0 %866
      %870 = vset.pattern.permute.xlu0 0
      %871 = vperm.xlu0 %870, %v837
      %v872 = vpop.permute.xlu0 %871
      %875 = vset.pattern.permute.xlu0 0
      %876 = vperm.xlu0 %875, %v838
      %v877 = vpop.permute.xlu0 %876
      %v887 = vunpack.c.l.b16 %v823
      %v888 = vunpack.c.l.b16 %v824
      %v889 = vunpack.c.l.b16 %v825
      %v890 = vunpack.c.l.b16 %v826
      %v891 = vunpack.c.l.b16 %v827
      %v892 = vunpack.c.l.b16 %v828
      %v893 = vunpack.c.l.b16 %v829
      %v894 = vunpack.c.l.b16 %v830
      %v895 = vpack.c.b16 %v888, %v887
      %v896 = vpack.c.b16 %v890, %v889
      %v897 = vpack.c.b16 %v892, %v891
      %v898 = vpack.c.b16 %v894, %v893
      %v900 = vsel %vm427, %v895, 0
      %v903 = vsel %vm427, %v896, 0
      %v906 = vsel %vm427, %v897, 0
      %v909 = vsel %vm427, %v898, 0
      %911 = vmatprep.subr.bf16.mxu0 %v808
      %912 = vmatpush1.bf16.msra.mxu0 %v807
      %913 = vmatprep.subr.bf16.mxu0 0
      %914 = vmatpush1.bf16.msra.mxu0 0
      %915 = vmatprep.subr.bf16.mxu0 0
      %916 = vmatpush1.bf16.msra.mxu0 0
      %917 = vmatprep.subr.bf16.mxu0 0
      %918 = vmatpush1.bf16.msra.mxu0 0
      %919 = vmatprep.subr.bf16.mxu0 0
      %920 = vmatpush1.bf16.msra.mxu0 0
      %921 = vmatprep.subr.bf16.mxu0 0
      %922 = vmatpush1.bf16.msra.mxu0 0
      %923 = vmatprep.subr.bf16.mxu0 0
      %924 = vmatpush1.bf16.msra.mxu0 0
      %925 = vmatprep.subr.bf16.mxu0 0
      %926 = vmatpush1.bf16.msra.mxu0 0
      %927 = vmatprep.subr.bf16.mxu0 0
      %928 = vmatpush1.bf16.msra.mxu0 0
      %929 = vmatprep.subr.bf16.mxu0 0
      %930 = vmatpush1.bf16.msra.mxu0 0
      %931 = vmatprep.subr.bf16.mxu0 0
      %932 = vmatpush1.bf16.msra.mxu0 0
      %933 = vmatprep.subr.bf16.mxu0 0
      %934 = vmatpush1.bf16.msra.mxu0 0
      %935 = vmatprep.subr.bf16.mxu0 0
      %936 = vmatpush1.bf16.msra.mxu0 0
      %937 = vmatprep.subr.bf16.mxu0 0
      %938 = vmatpush1.bf16.msra.mxu0 0
      %939 = vmatprep.subr.bf16.mxu0 0
      %940 = vmatpush1.bf16.msra.mxu0 0
      %941 = vmatprep.subr.bf16.mxu0 0
      %942 = vmatpush1.bf16.msra.mxu0 0
      %943 = vmatprep.mubr.bf16.mxu0 0
      %944 = vmatmul.mubr.bf16.gmra.mrb[0].mxu0 %v900
      %v945 = vpop.f32.mrb[0].mxu0
      %v946 = vadd.f32 %v842, %v945
      %v947 = vpop.f32.mrb[0].mxu0
      %v948 = vadd.f32 %v842, %v947
      %v949 = vpop.f32.mrb[0].mxu0
      %v950 = vadd.f32 %v847, %v949
      %v951 = vpop.f32.mrb[0].mxu0
      %v952 = vadd.f32 %v847, %v951
      %953 = vmatprep.mubr.bf16.mxu0 0
      %954 = vmatmul.mubr.bf16.gmra.mrb[0].mxu0 %v903
      %v955 = vpop.f32.mrb[0].mxu0
      %v956 = vadd.f32 %v852, %v955
      %v957 = vpop.f32.mrb[0].mxu0
      %v958 = vadd.f32 %v852, %v957
      %v959 = vpop.f32.mrb[0].mxu0
      %v960 = vadd.f32 %v857, %v959
      %v961 = vpop.f32.mrb[0].mxu0
      %v962 = vadd.f32 %v857, %v961
      %963 = vmatprep.mubr.bf16.mxu0 0
      %964 = vmatmul.mubr.bf16.gmra.mrb[0].mxu0 %v906
      %v965 = vpop.f32.mrb[0].mxu0
      %v966 = vadd.f32 %v862, %v965
      %v967 = vpop.f32.mrb[0].mxu0
      %v968 = vadd.f32 %v862, %v967
      %v969 = vpop.f32.mrb[0].mxu0
      %v970 = vadd.f32 %v867, %v969
      %v971 = vpop.f32.mrb[0].mxu0
      %v972 = vadd.f32 %v867, %v971
      %973 = vmatprep.mubr.bf16.mxu0 0
      %974 = vmatmul.mubr.bf16.gmra.mrb[0].mxu0 %v909
      %v975 = vpop.f32.mrb[0].mxu0
      %v976 = vadd.f32 %v872, %v975
      %v977 = vpop.f32.mrb[0].mxu0
      %v978 = vadd.f32 %v872, %v977
      %v979 = vpop.f32.mrb[0].mxu0
      %v980 = vadd.f32 %v877, %v979
      %v981 = vpop.f32.mrb[0].mxu0
      %v982 = vadd.f32 %v877, %v981
      %983 = vdwg.mxu0
      %984 = vmatprep.subr.bf16.mxu0 %v810
      %985 = vmatpush1.bf16.msra.mxu0 %v809
      %986 = vmatprep.subr.bf16.mxu0 0
      %987 = vmatpush1.bf16.msra.mxu0 0
      %988 = vmatprep.subr.bf16.mxu0 0
      %989 = vmatpush1.bf16.msra.mxu0 0
      %990 = vmatprep.subr.bf16.mxu0 0
      %991 = vmatpush1.bf16.msra.mxu0 0
      %992 = vmatprep.subr.bf16.mxu0 0
      %993 = vmatpush1.bf16.msra.mxu0 0
      %994 = vmatprep.subr.bf16.mxu0 0
      %995 = vmatpush1.bf16.msra.mxu0 0
      %996 = vmatprep.subr.bf16.mxu0 0
      %997 = vmatpush1.bf16.msra.mxu0 0
      %998 = vmatprep.subr.bf16.mxu0 0
      %999 = vmatpush1.bf16.msra.mxu0 0
      %1000 = vmatprep.subr.bf16.mxu0 0
      %1001 = vmatpush1.bf16.msra.mxu0 0
      %1002 = vmatprep.subr.bf16.mxu0 0
      %1003 = vmatpush1.bf16.msra.mxu0 0
      %1004 = vmatprep.subr.bf16.mxu0 0
      %1005 = vmatpush1.bf16.msra.mxu0 0
      %1006 = vmatprep.subr.bf16.mxu0 0
      %1007 = vmatpush1.bf16.msra.mxu0 0
      %1008 = vmatprep.subr.bf16.mxu0 0
      %1009 = vmatpush1.bf16.msra.mxu0 0
      %1010 = vmatprep.subr.bf16.mxu0 0
      %1011 = vmatpush1.bf16.msra.mxu0 0
      %1012 = vmatprep.subr.bf16.mxu0 0
      %1013 = vmatpush1.bf16.msra.mxu0 0
      %1014 = vmatprep.subr.bf16.mxu0 0
      %1015 = vmatpush1.bf16.msra.mxu0 0
      %1016 = vmatprep.mubr.bf16.mxu0 0
      %1017 = vmatmul.mubr.bf16.gmra.mrb[0].mxu0 %v900
      %v1018 = vpop.f32.mrb[0].mxu0
      %v1019 = vadd.f32 %v842, %v1018
      %v1020 = vpop.f32.mrb[0].mxu0
      %v1021 = vadd.f32 %v842, %v1020
      %v1022 = vpop.f32.mrb[0].mxu0
      %v1023 = vadd.f32 %v847, %v1022
      %v1024 = vpop.f32.mrb[0].mxu0
      %v1025 = vadd.f32 %v847, %v1024
      %1026 = vmatprep.mubr.bf16.mxu0 0
      %1027 = vmatmul.mubr.bf16.gmra.mrb[0].mxu0 %v903
      %v1028 = vpop.f32.mrb[0].mxu0
      %v1029 = vadd.f32 %v852, %v1028
      %v1030 = vpop.f32.mrb[0].mxu0
      %v1031 = vadd.f32 %v852, %v1030
      %v1032 = vpop.f32.mrb[0].mxu0
      %v1033 = vadd.f32 %v857, %v1032
      %v1034 = vpop.f32.mrb[0].mxu0
      %v1035 = vadd.f32 %v857, %v1034
      %1036 = vmatprep.mubr.bf16.mxu0 0
      %1037 = vmatmul.mubr.bf16.gmra.mrb[0].mxu0 %v906
      %v1038 = vpop.f32.mrb[0].mxu0
      %v1039 = vadd.f32 %v862, %v1038
      %v1040 = vpop.f32.mrb[0].mxu0
      %v1041 = vadd.f32 %v862, %v1040
      %v1042 = vpop.f32.mrb[0].mxu0
      %v1043 = vadd.f32 %v867, %v1042
      %v1044 = vpop.f32.mrb[0].mxu0
      %v1045 = vadd.f32 %v867, %v1044
      %1046 = vmatprep.mubr.bf16.mxu0 0
      %1047 = vmatmul.mubr.bf16.gmra.mrb[0].mxu0 %v909
      %v1048 = vpop.f32.mrb[0].mxu0
      %v1049 = vadd.f32 %v872, %v1048
      %v1050 = vpop.f32.mrb[0].mxu0
      %v1051 = vadd.f32 %v872, %v1050
      %v1052 = vpop.f32.mrb[0].mxu0
      %v1053 = vadd.f32 %v877, %v1052
      %v1054 = vpop.f32.mrb[0].mxu0
      %v1055 = vadd.f32 %v877, %v1054
      %1056 = vdwg.mxu0
      %1057 = vmatprep.subr.bf16.mxu0 %v812
      %1058 = vmatpush1.bf16.msra.mxu0 %v811
      %1059 = vmatprep.subr.bf16.mxu0 0
      %1060 = vmatpush1.bf16.msra.mxu0 0
      %1061 = vmatprep.subr.bf16.mxu0 0
      %1062 = vmatpush1.bf16.msra.mxu0 0
      %1063 = vmatprep.subr.bf16.mxu0 0
      %1064 = vmatpush1.bf16.msra.mxu0 0
      %1065 = vmatprep.subr.bf16.mxu0 0
      %1066 = vmatpush1.bf16.msra.mxu0 0
      %1067 = vmatprep.subr.bf16.mxu0 0
      %1068 = vmatpush1.bf16.msra.mxu0 0
      %1069 = vmatprep.subr.bf16.mxu0 0
      %1070 = vmatpush1.bf16.msra.mxu0 0
      %1071 = vmatprep.subr.bf16.mxu0 0
      %1072 = vmatpush1.bf16.msra.mxu0 0
      %1073 = vmatprep.subr.bf16.mxu0 0
      %1074 = vmatpush1.bf16.msra.mxu0 0
      %1075 = vmatprep.subr.bf16.mxu0 0
      %1076 = vmatpush1.bf16.msra.mxu0 0
      %1077 = vmatprep.subr.bf16.mxu0 0
      %1078 = vmatpush1.bf16.msra.mxu0 0
      %1079 = vmatprep.subr.bf16.mxu0 0
      %1080 = vmatpush1.bf16.msra.mxu0 0
      %1081 = vmatprep.subr.bf16.mxu0 0
      %1082 = vmatpush1.bf16.msra.mxu0 0
      %1083 = vmatprep.subr.bf16.mxu0 0
      %1084 = vmatpush1.bf16.msra.mxu0 0
      %1085 = vmatprep.subr.bf16.mxu0 0
      %1086 = vmatpush1.bf16.msra.mxu0 0
      %1087 = vmatprep.subr.bf16.mxu0 0
      %1088 = vmatpush1.bf16.msra.mxu0 0
      %1089 = vmatprep.mubr.bf16.mxu0 0
      %1090 = vmatmul.mubr.bf16.gmra.mrb[0].mxu0 %v900
      %v1091 = vpop.f32.mrb[0].mxu0
      %v1092 = vadd.f32 %v842, %v1091
      %v1093 = vpop.f32.mrb[0].mxu0
      %v1094 = vadd.f32 %v842, %v1093
      %v1095 = vpop.f32.mrb[0].mxu0
      %v1096 = vadd.f32 %v847, %v1095
      %v1097 = vpop.f32.mrb[0].mxu0
      %v1098 = vadd.f32 %v847, %v1097
      %1099 = vmatprep.mubr.bf16.mxu0 0
      %1100 = vmatmul.mubr.bf16.gmra.mrb[0].mxu0 %v903
      %v1101 = vpop.f32.mrb[0].mxu0
      %v1102 = vadd.f32 %v852, %v1101
      %v1103 = vpop.f32.mrb[0].mxu0
      %v1104 = vadd.f32 %v852, %v1103
      %v1105 = vpop.f32.mrb[0].mxu0
      %v1106 = vadd.f32 %v857, %v1105
      %v1107 = vpop.f32.mrb[0].mxu0
      %v1108 = vadd.f32 %v857, %v1107
      %1109 = vmatprep.mubr.bf16.mxu0 0
      %1110 = vmatmul.mubr.bf16.gmra.mrb[0].mxu0 %v906
      %v1111 = vpop.f32.mrb[0].mxu0
      %v1112 = vadd.f32 %v862, %v1111
      %v1113 = vpop.f32.mrb[0].mxu0
      %v1114 = vadd.f32 %v862, %v1113
      %v1115 = vpop.f32.mrb[0].mxu0
      %v1116 = vadd.f32 %v867, %v1115
      %v1117 = vpop.f32.mrb[0].mxu0
      %v1118 = vadd.f32 %v867, %v1117
      %1119 = vmatprep.mubr.bf16.mxu0 0
      %1120 = vmatmul.mubr.bf16.gmra.mrb[0].mxu0 %v909
      %v1121 = vpop.f32.mrb[0].mxu0
      %v1122 = vadd.f32 %v872, %v1121
      %v1123 = vpop.f32.mrb[0].mxu0
      %v1124 = vadd.f32 %v872, %v1123
      %v1125 = vpop.f32.mrb[0].mxu0
      %v1126 = vadd.f32 %v877, %v1125
      %v1127 = vpop.f32.mrb[0].mxu0
      %v1128 = vadd.f32 %v877, %v1127
      %1129 = vdwg.mxu0
      %1130 = vmatprep.subr.bf16.mxu0 %v814
      %1131 = vmatpush1.bf16.msra.mxu0 %v813
      %1132 = vmatprep.subr.bf16.mxu0 0
      %1133 = vmatpush1.bf16.msra.mxu0 0
      %1134 = vmatprep.subr.bf16.mxu0 0
      %1135 = vmatpush1.bf16.msra.mxu0 0
      %1136 = vmatprep.subr.bf16.mxu0 0
      %1137 = vmatpush1.bf16.msra.mxu0 0
      %1138 = vmatprep.subr.bf16.mxu0 0
      %1139 = vmatpush1.bf16.msra.mxu0 0
      %1140 = vmatprep.subr.bf16.mxu0 0
      %1141 = vmatpush1.bf16.msra.mxu0 0
      %1142 = vmatprep.subr.bf16.mxu0 0
      %1143 = vmatpush1.bf16.msra.mxu0 0
      %1144 = vmatprep.subr.bf16.mxu0 0
      %1145 = vmatpush1.bf16.msra.mxu0 0
      %1146 = vmatprep.subr.bf16.mxu0 0
      %1147 = vmatpush1.bf16.msra.mxu0 0
      %1148 = vmatprep.subr.bf16.mxu0 0
      %1149 = vmatpush1.bf16.msra.mxu0 0
      %1150 = vmatprep.subr.bf16.mxu0 0
      %1151 = vmatpush1.bf16.msra.mxu0 0
      %1152 = vmatprep.subr.bf16.mxu0 0
      %1153 = vmatpush1.bf16.msra.mxu0 0
      %1154 = vmatprep.subr.bf16.mxu0 0
      %1155 = vmatpush1.bf16.msra.mxu0 0
      %1156 = vmatprep.subr.bf16.mxu0 0
      %1157 = vmatpush1.bf16.msra.mxu0 0
      %1158 = vmatprep.subr.bf16.mxu0 0
      %1159 = vmatpush1.bf16.msra.mxu0 0
      %1160 = vmatprep.subr.bf16.mxu0 0
      %1161 = vmatpush1.bf16.msra.mxu0 0
      %1162 = vmatprep.mubr.bf16.mxu0 0
      %1163 = vmatmul.mubr.bf16.gmra.mrb[0].mxu0 %v900
      %v1164 = vpop.f32.mrb[0].mxu0
      %v1165 = vadd.f32 %v842, %v1164
      %v1166 = vpop.f32.mrb[0].mxu0
      %v1167 = vadd.f32 %v842, %v1166
      %v1168 = vpop.f32.mrb[0].mxu0
      %v1169 = vadd.f32 %v847, %v1168
      %v1170 = vpop.f32.mrb[0].mxu0
      %v1171 = vadd.f32 %v847, %v1170
      %1172 = vmatprep.mubr.bf16.mxu0 0
      %1173 = vmatmul.mubr.bf16.gmra.mrb[0].mxu0 %v903
      %v1174 = vpop.f32.mrb[0].mxu0
      %v1175 = vadd.f32 %v852, %v1174
      %v1176 = vpop.f32.mrb[0].mxu0
      %v1177 = vadd.f32 %v852, %v1176
      %v1178 = vpop.f32.mrb[0].mxu0
      %v1179 = vadd.f32 %v857, %v1178
      %v1180 = vpop.f32.mrb[0].mxu0
      %v1181 = vadd.f32 %v857, %v1180
      %1182 = vmatprep.mubr.bf16.mxu0 0
      %1183 = vmatmul.mubr.bf16.gmra.mrb[0].mxu0 %v906
      %v1184 = vpop.f32.mrb[0].mxu0
      %v1185 = vadd.f32 %v862, %v1184
      %v1186 = vpop.f32.mrb[0].mxu0
      %v1187 = vadd.f32 %v862, %v1186
      %v1188 = vpop.f32.mrb[0].mxu0
      %v1189 = vadd.f32 %v867, %v1188
      %v1190 = vpop.f32.mrb[0].mxu0
      %v1191 = vadd.f32 %v867, %v1190
      %1192 = vmatprep.mubr.bf16.mxu0 0
      %1193 = vmatmul.mubr.bf16.gmra.mrb[0].mxu0 %v909
      %v1194 = vpop.f32.mrb[0].mxu0
      %v1195 = vadd.f32 %v872, %v1194
      %v1196 = vpop.f32.mrb[0].mxu0
      %v1197 = vadd.f32 %v872, %v1196
      %v1198 = vpop.f32.mrb[0].mxu0
      %v1199 = vadd.f32 %v877, %v1198
      %v1200 = vpop.f32.mrb[0].mxu0
      %v1201 = vadd.f32 %v877, %v1200
      %1202 = vdwg.mxu0
      %1203 = vmatprep.subr.bf16.mxu0 %v816
      %1204 = vmatpush1.bf16.msra.mxu0 %v815
      %1205 = vmatprep.subr.bf16.mxu0 0
      %1206 = vmatpush1.bf16.msra.mxu0 0
      %1207 = vmatprep.subr.bf16.mxu0 0
      %1208 = vmatpush1.bf16.msra.mxu0 0
      %1209 = vmatprep.subr.bf16.mxu0 0
      %1210 = vmatpush1.bf16.msra.mxu0 0
      %1211 = vmatprep.subr.bf16.mxu0 0
      %1212 = vmatpush1.bf16.msra.mxu0 0
      %1213 = vmatprep.subr.bf16.mxu0 0
      %1214 = vmatpush1.bf16.msra.mxu0 0
      %1215 = vmatprep.subr.bf16.mxu0 0
      %1216 = vmatpush1.bf16.msra.mxu0 0
      %1217 = vmatprep.subr.bf16.mxu0 0
      %1218 = vmatpush1.bf16.msra.mxu0 0
      %1219 = vmatprep.subr.bf16.mxu0 0
      %1220 = vmatpush1.bf16.msra.mxu0 0
      %1221 = vmatprep.subr.bf16.mxu0 0
      %1222 = vmatpush1.bf16.msra.mxu0 0
      %1223 = vmatprep.subr.bf16.mxu0 0
      %1224 = vmatpush1.bf16.msra.mxu0 0
      %1225 = vmatprep.subr.bf16.mxu0 0
      %1226 = vmatpush1.bf16.msra.mxu0 0
      %1227 = vmatprep.subr.bf16.mxu0 0
      %1228 = vmatpush1.bf16.msra.mxu0 0
      %1229 = vmatprep.subr.bf16.mxu0 0
      %1230 = vmatpush1.bf16.msra.mxu0 0
      %1231 = vmatprep.subr.bf16.mxu0 0
      %1232 = vmatpush1.bf16.msra.mxu0 0
      %1233 = vmatprep.subr.bf16.mxu0 0
      %1234 = vmatpush1.bf16.msra.mxu0 0
      %1235 = vmatprep.mubr.bf16.mxu0 0
      %1236 = vmatmul.mubr.bf16.gmra.mrb[0].mxu0 %v900
      %v1237 = vpop.f32.mrb[0].mxu0
      %v1238 = vadd.f32 %v842, %v1237
      %v1239 = vpop.f32.mrb[0].mxu0
      %v1240 = vadd.f32 %v842, %v1239
      %v1241 = vpop.f32.mrb[0].mxu0
      %v1242 = vadd.f32 %v847, %v1241
      %v1243 = vpop.f32.mrb[0].mxu0
      %v1244 = vadd.f32 %v847, %v1243
      %1245 = vmatprep.mubr.bf16.mxu0 0
      %1246 = vmatmul.mubr.bf16.gmra.mrb[0].mxu0 %v903
      %v1247 = vpop.f32.mrb[0].mxu0
      %v1248 = vadd.f32 %v852, %v1247
      %v1249 = vpop.f32.mrb[0].mxu0
      %v1250 = vadd.f32 %v852, %v1249
      %v1251 = vpop.f32.mrb[0].mxu0
      %v1252 = vadd.f32 %v857, %v1251
      %v1253 = vpop.f32.mrb[0].mxu0
      %v1254 = vadd.f32 %v857, %v1253
      %1255 = vmatprep.mubr.bf16.mxu0 0
      %1256 = vmatmul.mubr.bf16.gmra.mrb[0].mxu0 %v906
      %v1257 = vpop.f32.mrb[0].mxu0
      %v1258 = vadd.f32 %v862, %v1257
      %v1259 = vpop.f32.mrb[0].mxu0
      %v1260 = vadd.f32 %v862, %v1259
      %v1261 = vpop.f32.mrb[0].mxu0
      %v1262 = vadd.f32 %v867, %v1261
      %v1263 = vpop.f32.mrb[0].mxu0
      %v1264 = vadd.f32 %v867, %v1263
      %1265 = vmatprep.mubr.bf16.mxu0 0
      %1266 = vmatmul.mubr.bf16.gmra.mrb[0].mxu0 %v909
      %v1267 = vpop.f32.mrb[0].mxu0
      %v1268 = vadd.f32 %v872, %v1267
      %v1269 = vpop.f32.mrb[0].mxu0
      %v1270 = vadd.f32 %v872, %v1269
      %v1271 = vpop.f32.mrb[0].mxu0
      %v1272 = vadd.f32 %v877, %v1271
      %v1273 = vpop.f32.mrb[0].mxu0
      %v1274 = vadd.f32 %v877, %v1273
      %1275 = vdwg.mxu0
      %1276 = vmatprep.subr.bf16.mxu0 %v818
      %1277 = vmatpush1.bf16.msra.mxu0 %v817
      %1278 = vmatprep.subr.bf16.mxu0 0
      %1279 = vmatpush1.bf16.msra.mxu0 0
      %1280 = vmatprep.subr.bf16.mxu0 0
      %1281 = vmatpush1.bf16.msra.mxu0 0
      %1282 = vmatprep.subr.bf16.mxu0 0
      %1283 = vmatpush1.bf16.msra.mxu0 0
      %1284 = vmatprep.subr.bf16.mxu0 0
      %1285 = vmatpush1.bf16.msra.mxu0 0
      %1286 = vmatprep.subr.bf16.mxu0 0
      %1287 = vmatpush1.bf16.msra.mxu0 0
      %1288 = vmatprep.subr.bf16.mxu0 0
      %1289 = vmatpush1.bf16.msra.mxu0 0
      %1290 = vmatprep.subr.bf16.mxu0 0
      %1291 = vmatpush1.bf16.msra.mxu0 0
      %1292 = vmatprep.subr.bf16.mxu0 0
      %1293 = vmatpush1.bf16.msra.mxu0 0
      %1294 = vmatprep.subr.bf16.mxu0 0
      %1295 = vmatpush1.bf16.msra.mxu0 0
      %1296 = vmatprep.subr.bf16.mxu0 0
      %1297 = vmatpush1.bf16.msra.mxu0 0
      %1298 = vmatprep.subr.bf16.mxu0 0
      %1299 = vmatpush1.bf16.msra.mxu0 0
      %1300 = vmatprep.subr.bf16.mxu0 0
      %1301 = vmatpush1.bf16.msra.mxu0 0
      %1302 = vmatprep.subr.bf16.mxu0 0
      %1303 = vmatpush1.bf16.msra.mxu0 0
      %1304 = vmatprep.subr.bf16.mxu0 0
      %1305 = vmatpush1.bf16.msra.mxu0 0
      %1306 = vmatprep.subr.bf16.mxu0 0
      %1307 = vmatpush1.bf16.msra.mxu0 0
      %1308 = vmatprep.mubr.bf16.mxu0 0
      %1309 = vmatmul.mubr.bf16.gmra.mrb[0].mxu0 %v900
      %v1310 = vpop.f32.mrb[0].mxu0
      %v1311 = vadd.f32 %v842, %v1310
      %v1312 = vpop.f32.mrb[0].mxu0
      %v1313 = vadd.f32 %v842, %v1312
      %v1314 = vpop.f32.mrb[0].mxu0
      %v1315 = vadd.f32 %v847, %v1314
      %v1316 = vpop.f32.mrb[0].mxu0
      %v1317 = vadd.f32 %v847, %v1316
      %1318 = vmatprep.mubr.bf16.mxu0 0
      %1319 = vmatmul.mubr.bf16.gmra.mrb[0].mxu0 %v903
      %v1320 = vpop.f32.mrb[0].mxu0
      %v1321 = vadd.f32 %v852, %v1320
      %v1322 = vpop.f32.mrb[0].mxu0
      %v1323 = vadd.f32 %v852, %v1322
      %v1324 = vpop.f32.mrb[0].mxu0
      %v1325 = vadd.f32 %v857, %v1324
      %v1326 = vpop.f32.mrb[0].mxu0
      %v1327 = vadd.f32 %v857, %v1326
      %1328 = vmatprep.mubr.bf16.mxu0 0
      %1329 = vmatmul.mubr.bf16.gmra.mrb[0].mxu0 %v906
      %v1330 = vpop.f32.mrb[0].mxu0
      %v1331 = vadd.f32 %v862, %v1330
      %v1332 = vpop.f32.mrb[0].mxu0
      %v1333 = vadd.f32 %v862, %v1332
      %v1334 = vpop.f32.mrb[0].mxu0
      %v1335 = vadd.f32 %v867, %v1334
      %v1336 = vpop.f32.mrb[0].mxu0
      %v1337 = vadd.f32 %v867, %v1336
      %1338 = vmatprep.mubr.bf16.mxu0 0
      %1339 = vmatmul.mubr.bf16.gmra.mrb[0].mxu0 %v909
      %v1340 = vpop.f32.mrb[0].mxu0
      %v1341 = vadd.f32 %v872, %v1340
      %v1342 = vpop.f32.mrb[0].mxu0
      %v1343 = vadd.f32 %v872, %v1342
      %v1344 = vpop.f32.mrb[0].mxu0
      %v1345 = vadd.f32 %v877, %v1344
      %v1346 = vpop.f32.mrb[0].mxu0
      %v1347 = vadd.f32 %v877, %v1346
      %1348 = vdwg.mxu0
      %1349 = vmatprep.subr.bf16.mxu0 %v820
      %1350 = vmatpush1.bf16.msra.mxu0 %v819
      %1351 = vmatprep.subr.bf16.mxu0 0
      %1352 = vmatpush1.bf16.msra.mxu0 0
      %1353 = vmatprep.subr.bf16.mxu0 0
      %1354 = vmatpush1.bf16.msra.mxu0 0
      %1355 = vmatprep.subr.bf16.mxu0 0
      %1356 = vmatpush1.bf16.msra.mxu0 0
      %1357 = vmatprep.subr.bf16.mxu0 0
      %1358 = vmatpush1.bf16.msra.mxu0 0
      %1359 = vmatprep.subr.bf16.mxu0 0
      %1360 = vmatpush1.bf16.msra.mxu0 0
      %1361 = vmatprep.subr.bf16.mxu0 0
      %1362 = vmatpush1.bf16.msra.mxu0 0
      %1363 = vmatprep.subr.bf16.mxu0 0
      %1364 = vmatpush1.bf16.msra.mxu0 0
      %1365 = vmatprep.subr.bf16.mxu0 0
      %1366 = vmatpush1.bf16.msra.mxu0 0
      %1367 = vmatprep.subr.bf16.mxu0 0
      %1368 = vmatpush1.bf16.msra.mxu0 0
      %1369 = vmatprep.subr.bf16.mxu0 0
      %1370 = vmatpush1.bf16.msra.mxu0 0
      %1371 = vmatprep.subr.bf16.mxu0 0
      %1372 = vmatpush1.bf16.msra.mxu0 0
      %1373 = vmatprep.subr.bf16.mxu0 0
      %1374 = vmatpush1.bf16.msra.mxu0 0
      %1375 = vmatprep.subr.bf16.mxu0 0
      %1376 = vmatpush1.bf16.msra.mxu0 0
      %1377 = vmatprep.subr.bf16.mxu0 0
      %1378 = vmatpush1.bf16.msra.mxu0 0
      %1379 = vmatprep.subr.bf16.mxu0 0
      %1380 = vmatpush1.bf16.msra.mxu0 0
      %1381 = vmatprep.mubr.bf16.mxu0 0
      %1382 = vmatmul.mubr.bf16.gmra.mrb[0].mxu0 %v900
      %v1383 = vpop.f32.mrb[0].mxu0
      %v1384 = vadd.f32 %v842, %v1383
      %v1385 = vpop.f32.mrb[0].mxu0
      %v1386 = vadd.f32 %v842, %v1385
      %v1387 = vpop.f32.mrb[0].mxu0
      %v1388 = vadd.f32 %v847, %v1387
      %v1389 = vpop.f32.mrb[0].mxu0
      %v1390 = vadd.f32 %v847, %v1389
      %1391 = vmatprep.mubr.bf16.mxu0 0
      %1392 = vmatmul.mubr.bf16.gmra.mrb[0].mxu0 %v903
      %v1393 = vpop.f32.mrb[0].mxu0
      %v1394 = vadd.f32 %v852, %v1393
      %v1395 = vpop.f32.mrb[0].mxu0
      %v1396 = vadd.f32 %v852, %v1395
      %v1397 = vpop.f32.mrb[0].mxu0
      %v1398 = vadd.f32 %v857, %v1397
      %v1399 = vpop.f32.mrb[0].mxu0
      %v1400 = vadd.f32 %v857, %v1399
      %1401 = vmatprep.mubr.bf16.mxu0 0
      %1402 = vmatmul.mubr.bf16.gmra.mrb[0].mxu0 %v906
      %v1403 = vpop.f32.mrb[0].mxu0
      %v1404 = vadd.f32 %v862, %v1403
      %v1405 = vpop.f32.mrb[0].mxu0
      %v1406 = vadd.f32 %v862, %v1405
      %v1407 = vpop.f32.mrb[0].mxu0
      %v1408 = vadd.f32 %v867, %v1407
      %v1409 = vpop.f32.mrb[0].mxu0
      %v1410 = vadd.f32 %v867, %v1409
      %1411 = vmatprep.mubr.bf16.mxu0 0
      %1412 = vmatmul.mubr.bf16.gmra.mrb[0].mxu0 %v909
      %v1413 = vpop.f32.mrb[0].mxu0
      %v1414 = vadd.f32 %v872, %v1413
      %v1415 = vpop.f32.mrb[0].mxu0
      %v1416 = vadd.f32 %v872, %v1415
      %v1417 = vpop.f32.mrb[0].mxu0
      %v1418 = vadd.f32 %v877, %v1417
      %v1419 = vpop.f32.mrb[0].mxu0
      %v1420 = vadd.f32 %v877, %v1419
      %1421 = vdwg.mxu0
      %1422 = vmatprep.subr.bf16.mxu0 %v822
      %1423 = vmatpush1.bf16.msra.mxu0 %v821
      %1424 = vmatprep.subr.bf16.mxu0 0
      %1425 = vmatpush1.bf16.msra.mxu0 0
      %1426 = vmatprep.subr.bf16.mxu0 0
      %1427 = vmatpush1.bf16.msra.mxu0 0
      %1428 = vmatprep.subr.bf16.mxu0 0
      %1429 = vmatpush1.bf16.msra.mxu0 0
      %1430 = vmatprep.subr.bf16.mxu0 0
      %1431 = vmatpush1.bf16.msra.mxu0 0
      %1432 = vmatprep.subr.bf16.mxu0 0
      %1433 = vmatpush1.bf16.msra.mxu0 0
      %1434 = vmatprep.subr.bf16.mxu0 0
      %1435 = vmatpush1.bf16.msra.mxu0 0
      %1436 = vmatprep.subr.bf16.mxu0 0
      %1437 = vmatpush1.bf16.msra.mxu0 0
      %1438 = vmatprep.subr.bf16.mxu0 0
      %1439 = vmatpush1.bf16.msra.mxu0 0
      %1440 = vmatprep.subr.bf16.mxu0 0
      %1441 = vmatpush1.bf16.msra.mxu0 0
      %1442 = vmatprep.subr.bf16.mxu0 0
      %1443 = vmatpush1.bf16.msra.mxu0 0
      %1444 = vmatprep.subr.bf16.mxu0 0
      %1445 = vmatpush1.bf16.msra.mxu0 0
      %1446 = vmatprep.subr.bf16.mxu0 0
      %1447 = vmatpush1.bf16.msra.mxu0 0
      %1448 = vmatprep.subr.bf16.mxu0 0
      %1449 = vmatpush1.bf16.msra.mxu0 0
      %1450 = vmatprep.subr.bf16.mxu0 0
      %1451 = vmatpush1.bf16.msra.mxu0 0
      %1452 = vmatprep.subr.bf16.mxu0 0
      %1453 = vmatpush1.bf16.msra.mxu0 0
      %1454 = vmatprep.mubr.bf16.mxu0 0
      %1455 = vmatmul.mubr.bf16.gmra.mrb[0].mxu0 %v900
      %v1456 = vpop.f32.mrb[0].mxu0
      %v1457 = vadd.f32 %v842, %v1456
      %v1458 = vpop.f32.mrb[0].mxu0
      %v1459 = vadd.f32 %v842, %v1458
      %v1460 = vpop.f32.mrb[0].mxu0
      %v1461 = vadd.f32 %v847, %v1460
      %v1462 = vpop.f32.mrb[0].mxu0
      %v1463 = vadd.f32 %v847, %v1462
      %1464 = vmatprep.mubr.bf16.mxu0 0
      %1465 = vmatmul.mubr.bf16.gmra.mrb[0].mxu0 %v903
      %v1466 = vpop.f32.mrb[0].mxu0
      %v1467 = vadd.f32 %v852, %v1466
      %v1468 = vpop.f32.mrb[0].mxu0
      %v1469 = vadd.f32 %v852, %v1468
      %v1470 = vpop.f32.mrb[0].mxu0
      %v1471 = vadd.f32 %v857, %v1470
      %v1472 = vpop.f32.mrb[0].mxu0
      %v1473 = vadd.f32 %v857, %v1472
      %1474 = vmatprep.mubr.bf16.mxu0 0
      %1475 = vmatmul.mubr.bf16.gmra.mrb[0].mxu0 %v906
      %v1476 = vpop.f32.mrb[0].mxu0
      %v1477 = vadd.f32 %v862, %v1476
      %v1478 = vpop.f32.mrb[0].mxu0
      %v1479 = vadd.f32 %v862, %v1478
      %v1480 = vpop.f32.mrb[0].mxu0
      %v1481 = vadd.f32 %v867, %v1480
      %v1482 = vpop.f32.mrb[0].mxu0
      %v1483 = vadd.f32 %v867, %v1482
      %1484 = vmatprep.mubr.bf16.mxu0 0
      %1485 = vmatmul.mubr.bf16.gmra.mrb[0].mxu0 %v909
      %v1486 = vpop.f32.mrb[0].mxu0
      %v1487 = vadd.f32 %v872, %v1486
      %v1488 = vpop.f32.mrb[0].mxu0
      %v1489 = vadd.f32 %v872, %v1488
      %v1490 = vpop.f32.mrb[0].mxu0
      %v1491 = vadd.f32 %v877, %v1490
      %v1492 = vpop.f32.mrb[0].mxu0
      %v1493 = vadd.f32 %v877, %v1492
      %1494 = vdwg.mxu0
      %v1495 = vmax.f32 %v946, 0.0
      %v1496 = vmax.f32 %v948, 0.0
      %v1497 = vmax.f32 %v1019, 0.0
      %v1498 = vmax.f32 %v1021, 0.0
      %v1499 = vmax.f32 %v1092, 0.0
      %v1500 = vmax.f32 %v1094, 0.0
      %v1501 = vmax.f32 %v1165, 0.0
      %v1502 = vmax.f32 %v1167, 0.0
      %v1503 = vmax.f32 %v1238, 0.0
      %v1504 = vmax.f32 %v1240, 0.0
      %v1505 = vmax.f32 %v1311, 0.0
      %v1506 = vmax.f32 %v1313, 0.0
      %v1507 = vmax.f32 %v1384, 0.0
      %v1508 = vmax.f32 %v1386, 0.0
      %v1509 = vmax.f32 %v1457, 0.0
      %v1510 = vmax.f32 %v1459, 0.0
      %v1511 = vmax.f32 %v950, 0.0
      %v1512 = vmax.f32 %v952, 0.0
      %v1513 = vmax.f32 %v1023, 0.0
      %v1514 = vmax.f32 %v1025, 0.0
      %v1515 = vmax.f32 %v1096, 0.0
      %v1516 = vmax.f32 %v1098, 0.0
      %v1517 = vmax.f32 %v1169, 0.0
      %v1518 = vmax.f32 %v1171, 0.0
      %v1519 = vmax.f32 %v1242, 0.0
      %v1520 = vmax.f32 %v1244, 0.0
      %v1521 = vmax.f32 %v1315, 0.0
      %v1522 = vmax.f32 %v1317, 0.0
      %v1523 = vmax.f32 %v1388, 0.0
      %v1524 = vmax.f32 %v1390, 0.0
      %v1525 = vmax.f32 %v1461, 0.0
      %v1526 = vmax.f32 %v1463, 0.0
      %v1527 = vmax.f32 %v956, 0.0
      %v1528 = vmax.f32 %v958, 0.0
      %v1529 = vmax.f32 %v1029, 0.0
      %v1530 = vmax.f32 %v1031, 0.0
      %v1531 = vmax.f32 %v1102, 0.0
      %v1532 = vmax.f32 %v1104, 0.0
      %v1533 = vmax.f32 %v1175, 0.0
      %v1534 = vmax.f32 %v1177, 0.0
      %v1535 = vmax.f32 %v1248, 0.0
      %v1536 = vmax.f32 %v1250, 0.0
      %v1537 = vmax.f32 %v1321, 0.0
      %v1538 = vmax.f32 %v1323, 0.0
      %v1539 = vmax.f32 %v1394, 0.0
      %v1540 = vmax.f32 %v1396, 0.0
      %v1541 = vmax.f32 %v1467, 0.0
      %v1542 = vmax.f32 %v1469, 0.0
      %v1543 = vmax.f32 %v960, 0.0
      %v1544 = vmax.f32 %v962, 0.0
      %v1545 = vmax.f32 %v1033, 0.0
      %v1546 = vmax.f32 %v1035, 0.0
      %v1547 = vmax.f32 %v1106, 0.0
      %v1548 = vmax.f32 %v1108, 0.0
      %v1549 = vmax.f32 %v1179, 0.0
      %v1550 = vmax.f32 %v1181, 0.0
      %v1551 = vmax.f32 %v1252, 0.0
      %v1552 = vmax.f32 %v1254, 0.0
      %v1553 = vmax.f32 %v1325, 0.0
      %v1554 = vmax.f32 %v1327, 0.0
      %v1555 = vmax.f32 %v1398, 0.0
      %v1556 = vmax.f32 %v1400, 0.0
      %v1557 = vmax.f32 %v1471, 0.0
      %v1558 = vmax.f32 %v1473, 0.0
      %v1559 = vmax.f32 %v966, 0.0
      %v1560 = vmax.f32 %v968, 0.0
      %v1561 = vmax.f32 %v1039, 0.0
      %v1562 = vmax.f32 %v1041, 0.0
      %v1563 = vmax.f32 %v1112, 0.0
      %v1564 = vmax.f32 %v1114, 0.0
      %v1565 = vmax.f32 %v1185, 0.0
      %v1566 = vmax.f32 %v1187, 0.0
      %v1567 = vmax.f32 %v1258, 0.0
      %v1568 = vmax.f32 %v1260, 0.0
      %v1569 = vmax.f32 %v1331, 0.0
      %v1570 = vmax.f32 %v1333, 0.0
      %v1571 = vmax.f32 %v1404, 0.0
      %v1572 = vmax.f32 %v1406, 0.0
      %v1573 = vmax.f32 %v1477, 0.0
      %v1574 = vmax.f32 %v1479, 0.0
      %v1575 = vmax.f32 %v970, 0.0
      %v1576 = vmax.f32 %v972, 0.0
      %v1577 = vmax.f32 %v1043, 0.0
      %v1578 = vmax.f32 %v1045, 0.0
      %v1579 = vmax.f32 %v1116, 0.0
      %v1580 = vmax.f32 %v1118, 0.0
      %v1581 = vmax.f32 %v1189, 0.0
      %v1582 = vmax.f32 %v1191, 0.0
      %v1583 = vmax.f32 %v1262, 0.0
      %v1584 = vmax.f32 %v1264, 0.0
      %v1585 = vmax.f32 %v1335, 0.0
      %v1586 = vmax.f32 %v1337, 0.0
      %v1587 = vmax.f32 %v1408, 0.0
      %v1588 = vmax.f32 %v1410, 0.0
      %v1589 = vmax.f32 %v1481, 0.0
      %v1590 = vmax.f32 %v1483, 0.0
      %v1591 = vmax.f32 %v976, 0.0
      %v1592 = vmax.f32 %v978, 0.0
      %v1593 = vmax.f32 %v1049, 0.0
      %v1594 = vmax.f32 %v1051, 0.0
      %v1595 = vmax.f32 %v1122, 0.0
      %v1596 = vmax.f32 %v1124, 0.0
      %v1597 = vmax.f32 %v1195, 0.0
      %v1598 = vmax.f32 %v1197, 0.0
      %v1599 = vmax.f32 %v1268, 0.0
      %v1600 = vmax.f32 %v1270, 0.0
      %v1601 = vmax.f32 %v1341, 0.0
      %v1602 = vmax.f32 %v1343, 0.0
      %v1603 = vmax.f32 %v1414, 0.0
      %v1604 = vmax.f32 %v1416, 0.0
      %v1605 = vmax.f32 %v1487, 0.0
      %v1606 = vmax.f32 %v1489, 0.0
      %v1607 = vmax.f32 %v980, 0.0
      %v1608 = vmax.f32 %v982, 0.0
      %v1609 = vmax.f32 %v1053, 0.0
      %v1610 = vmax.f32 %v1055, 0.0
      %v1611 = vmax.f32 %v1126, 0.0
      %v1612 = vmax.f32 %v1128, 0.0
      %v1613 = vmax.f32 %v1199, 0.0
      %v1614 = vmax.f32 %v1201, 0.0
      %v1615 = vmax.f32 %v1272, 0.0
      %v1616 = vmax.f32 %v1274, 0.0
      %v1617 = vmax.f32 %v1345, 0.0
      %v1618 = vmax.f32 %v1347, 0.0
      %v1619 = vmax.f32 %v1418, 0.0
      %v1620 = vmax.f32 %v1420, 0.0
      %v1621 = vmax.f32 %v1491, 0.0
      %v1622 = vmax.f32 %v1493, 0.0
      %v1623 = vmax.f32 %v1495, %v1496
      %v1624 = vmax.f32 %v1511, %v1512
      %v1625 = vmax.f32 %v1527, %v1528
      %v1626 = vmax.f32 %v1543, %v1544
      %v1627 = vmax.f32 %v1559, %v1560
      %v1628 = vmax.f32 %v1575, %v1576
      %v1629 = vmax.f32 %v1591, %v1592
      %v1630 = vmax.f32 %v1607, %v1608
      %v1631 = vmax.f32 %v1497, %v1498
      %v1632 = vmax.f32 %v1513, %v1514
      %v1633 = vmax.f32 %v1529, %v1530
      %v1634 = vmax.f32 %v1545, %v1546
      %v1635 = vmax.f32 %v1561, %v1562
      %v1636 = vmax.f32 %v1577, %v1578
      %v1637 = vmax.f32 %v1593, %v1594
      %v1638 = vmax.f32 %v1609, %v1610
      %v1639 = vmax.f32 %v1499, %v1500
      %v1640 = vmax.f32 %v1515, %v1516
      %v1641 = vmax.f32 %v1531, %v1532
      %v1642 = vmax.f32 %v1547, %v1548
      %v1643 = vmax.f32 %v1563, %v1564
      %v1644 = vmax.f32 %v1579, %v1580
      %v1645 = vmax.f32 %v1595, %v1596
      %v1646 = vmax.f32 %v1611, %v1612
      %v1647 = vmax.f32 %v1501, %v1502
      %v1648 = vmax.f32 %v1517, %v1518
      %v1649 = vmax.f32 %v1533, %v1534
      %v1650 = vmax.f32 %v1549, %v1550
      %v1651 = vmax.f32 %v1565, %v1566
      %v1652 = vmax.f32 %v1581, %v1582
      %v1653 = vmax.f32 %v1597, %v1598
      %v1654 = vmax.f32 %v1613, %v1614
      %v1655 = vmax.f32 %v1503, %v1504
      %v1656 = vmax.f32 %v1519, %v1520
      %v1657 = vmax.f32 %v1535, %v1536
      %v1658 = vmax.f32 %v1551, %v1552
      %v1659 = vmax.f32 %v1567, %v1568
      %v1660 = vmax.f32 %v1583, %v1584
      %v1661 = vmax.f32 %v1599, %v1600
      %v1662 = vmax.f32 %v1615, %v1616
      %v1663 = vmax.f32 %v1505, %v1506
      %v1664 = vmax.f32 %v1521, %v1522
      %v1665 = vmax.f32 %v1537, %v1538
      %v1666 = vmax.f32 %v1553, %v1554
      %v1667 = vmax.f32 %v1569, %v1570
      %v1668 = vmax.f32 %v1585, %v1586
      %v1669 = vmax.f32 %v1601, %v1602
      %v1670 = vmax.f32 %v1617, %v1618
      %v1671 = vmax.f32 %v1507, %v1508
      %v1672 = vmax.f32 %v1523, %v1524
      %v1673 = vmax.f32 %v1539, %v1540
      %v1674 = vmax.f32 %v1555, %v1556
      %v1675 = vmax.f32 %v1571, %v1572
      %v1676 = vmax.f32 %v1587, %v1588
      %v1677 = vmax.f32 %v1603, %v1604
      %v1678 = vmax.f32 %v1619, %v1620
      %v1679 = vmax.f32 %v1509, %v1510
      %v1680 = vmax.f32 %v1525, %v1526
      %v1681 = vmax.f32 %v1541, %v1542
      %v1682 = vmax.f32 %v1557, %v1558
      %v1683 = vmax.f32 %v1573, %v1574
      %v1684 = vmax.f32 %v1589, %v1590
      %v1685 = vmax.f32 %v1605, %v1606
      %v1686 = vmax.f32 %v1621, %v1622
      %v1687 = vmax.f32 %v1623, %v1631
      %v1688 = vmax.f32 %v1624, %v1632
      %v1689 = vmax.f32 %v1625, %v1633
      %v1690 = vmax.f32 %v1626, %v1634
      %v1691 = vmax.f32 %v1627, %v1635
      %v1692 = vmax.f32 %v1628, %v1636
      %v1693 = vmax.f32 %v1629, %v1637
      %v1694 = vmax.f32 %v1630, %v1638
      %v1695 = vmax.f32 %v1639, %v1647
      %v1696 = vmax.f32 %v1640, %v1648
      %v1697 = vmax.f32 %v1641, %v1649
      %v1698 = vmax.f32 %v1642, %v1650
      %v1699 = vmax.f32 %v1643, %v1651
      %v1700 = vmax.f32 %v1644, %v1652
      %v1701 = vmax.f32 %v1645, %v1653
      %v1702 = vmax.f32 %v1646, %v1654
      %v1703 = vmax.f32 %v1655, %v1663
      %v1704 = vmax.f32 %v1656, %v1664
      %v1705 = vmax.f32 %v1657, %v1665
      %v1706 = vmax.f32 %v1658, %v1666
      %v1707 = vmax.f32 %v1659, %v1667
      %v1708 = vmax.f32 %v1660, %v1668
      %v1709 = vmax.f32 %v1661, %v1669
      %v1710 = vmax.f32 %v1662, %v1670
      %v1711 = vmax.f32 %v1671, %v1679
      %v1712 = vmax.f32 %v1672, %v1680
      %v1713 = vmax.f32 %v1673, %v1681
      %v1714 = vmax.f32 %v1674, %v1682
      %v1715 = vmax.f32 %v1675, %v1683
      %v1716 = vmax.f32 %v1676, %v1684
      %v1717 = vmax.f32 %v1677, %v1685
      %v1718 = vmax.f32 %v1678, %v1686
      %v1719 = vmax.f32 %v1687, %v1695
      %v1720 = vmax.f32 %v1688, %v1696
      %v1721 = vmax.f32 %v1689, %v1697
      %v1722 = vmax.f32 %v1690, %v1698
      %v1723 = vmax.f32 %v1691, %v1699
      %v1724 = vmax.f32 %v1692, %v1700
      %v1725 = vmax.f32 %v1693, %v1701
      %v1726 = vmax.f32 %v1694, %v1702
      %v1727 = vmax.f32 %v1703, %v1711
      %v1728 = vmax.f32 %v1704, %v1712
      %v1729 = vmax.f32 %v1705, %v1713
      %v1730 = vmax.f32 %v1706, %v1714
      %v1731 = vmax.f32 %v1707, %v1715
      %v1732 = vmax.f32 %v1708, %v1716
      %v1733 = vmax.f32 %v1709, %v1717
      %v1734 = vmax.f32 %v1710, %v1718
      %v1735 = vmax.f32 %v1719, %v1727
      %v1736 = vmax.f32 %v1720, %v1728
      %v1737 = vmax.f32 %v1721, %v1729
      %v1738 = vmax.f32 %v1722, %v1730
      %v1739 = vmax.f32 %v1723, %v1731
      %v1740 = vmax.f32 %v1724, %v1732
      %v1741 = vmax.f32 %v1725, %v1733
      %v1742 = vmax.f32 %v1726, %v1734
      %v1743 = vld [vmem:[%s302] sm:$0x1]
      %v1745 = vlaneseq
      %v1746 = vshrl.u32 %v1745, 7
      %v1747 = vsub.s32 0, %v1746
      %v1748 = vrot.slane %v1743, %v1747
      %v1750 = vmul.f32 %v1735, %v1748
      %v1751 = vmul.f32 %v1736, %v1748
      %v1752 = vmul.f32 %v1737, %v1748
      %v1753 = vmul.f32 %v1738, %v1748
      %v1754 = vmul.f32 %v1739, %v1748
      %v1755 = vmul.f32 %v1740, %v1748
      %v1756 = vmul.f32 %v1741, %v1748
      %v1757 = vmul.f32 %v1742, %v1748
      %1758 = vst [vmem:[%s310] sm:$0xff] %v1750
      %1759 = vst [vmem:[%s310 + $0x8] sm:$0xff] %v1751
      %1760 = vst [vmem:[%s310 + $0x10] sm:$0xff] %v1752
      %1761 = vst [vmem:[%s310 + $0x18] sm:$0xff] %v1753
      %1762 = vst [vmem:[%s310 + $0x20] sm:$0xff] %v1754
      %1763 = vst [vmem:[%s310 + $0x28] sm:$0xff] %v1755
      %1764 = vst [vmem:[%s310 + $0x30] sm:$0xff] %v1756
      %1765 = vst [vmem:[%s310 + $0x38] sm:$0xff] %v1757
      %p1766 = scmp.lt.s32.totalorder %s21, 1
      %s1767 = scalar_select %p1766, %s21, 1
      %p1768 = scmp.lt.s32.totalorder %s22, 0
      %s1769 = scalar_select %p1768, %s22, 0
      %s1770 = smul.addr %s1767, 8
      %s1771 = sadd.s32 %s1769, %s1770
      %s1772 = smul.addr %s1771, 8
      %s1773 = scalar_lea.vmem %s6, %s1772
      // Predicated region
      $region45: #{pointnet_sa_forward.3} parent=43 // pred_check
        %p1774 = pneg %p189
      $region46: #{pointnet_sa_forward.3} parent=43 // pred_check_branch
        %1776 = sbr.rel (%p1774) target = $region48
      $region47: #{pointnet_sa_forward.3} parent=43 // pred_region
        _
      $region48: #{pointnet_sa_forward.3} parent=43 // pred_fallthru
        _
    $region44: #{pointnet_sa_forward.3} parent=5 // pred_fallthru
      _
    %p1777 = scmp.le.s32.totalorder 2, %s12
    // Predicated region
    $region49: #{pointnet_sa_forward.3} parent=5 // pred_check
      %p1778 = pneg %p1777
    $region50: #{pointnet_sa_forward.3} parent=5 // pred_check_branch
      %1780 = sbr.rel (%p1778) target = $region52
    $region51: #{pointnet_sa_forward.3} parent=5 // pred_region
      %s1781 = ssub.s32 %s12, 2
      // Predicated region
      $region53: #{pointnet_sa_forward.3} parent=51 // pred_check
        %p1782 = pneg %p195
      $region54: #{pointnet_sa_forward.3} parent=51 // pred_check_branch
        %1784 = sbr.rel (%p1782) target = $region56
      $region55: #{pointnet_sa_forward.3} parent=51 // pred_region
        %p1785 = scmp.lt.s32.totalorder %s23, 1
        %s1786 = scalar_select %p1785, %s23, 1
        %p1787 = scmp.lt.s32.totalorder %s24, 0
        %s1788 = scalar_select %p1787, %s24, 0
        %s1789 = smul.addr %s1786, 8
        %s1790 = sadd.s32 %s1788, %s1789
        %s1791 = smul.addr %s1790, 8
        %s1792 = scalar_lea.vmem %s6, %s1791
      $region56: #{pointnet_sa_forward.3} parent=51 // pred_fallthru
        _
    $region52: #{pointnet_sa_forward.3} parent=5 // pred_fallthru
      _
  $region6: #{pointnet_sa_forward.3} parent=0 // loop_footer
    %s16 = sadd.s32 1, %s12
  $region7: #{pointnet_sa_forward.3} parent=0 // loop_footer_branch
    %11 = sbr.rel target = $region3
  $region8: #{pointnet_sa_forward.3} parent=0 // loop_exit
    _

</llo_original>
